<compile_context>
chip_gen: v5e
topology: v5e:2x2
jax: 0.10.0
libtpu: 0.0.40
codegen_flags: <defaults>
</compile_context>

<pallas_src>
import math
import functools

import numpy as np
import jax
import jax.numpy as jnp
from jax import lax
from jax.experimental import pallas as pl
from jax.experimental.pallas import tpu as pltpu


# ----------------------------- config (small) -----------------------------
N_LAYER = 2
N_HEAD = 4
N_EMBD = 32
BLOCK_SIZE = 16
VOCAB = 128
BATCH = 2
SEQ = 8
HEAD_DIM = N_EMBD // N_HEAD
LN_EPS = 1e-5
GELU_C = math.sqrt(2.0 / math.pi)
MXU_DTYPE = jnp.bfloat16          # matmul input dtype (accumulate in f32)
NEG_BIG = -1e30


# ------------------------------ kernel helpers ------------------------------
def _layernorm(x, g, b):
    mu = jnp.mean(x, axis=-1, keepdims=True)
    var = jnp.mean((x - mu) ** 2, axis=-1, keepdims=True)
    return (x - mu) * lax.rsqrt(var + LN_EPS) * g + b


def _mm(a, b):
    # standard A @ B on the MXU, bf16 inputs, f32 accumulation
    return jnp.dot(a.astype(MXU_DTYPE), b.astype(MXU_DTYPE),
                   preferred_element_type=jnp.float32)


def _mm_t(a, b):
    # A @ B^T (contract last dims of both), bf16 inputs, f32 accumulation
    return lax.dot_general(a.astype(MXU_DTYPE), b.astype(MXU_DTYPE),
                           dimension_numbers=(((1,), (1,)), ((), ())),
                           preferred_element_type=jnp.float32)


# ------------------------------ fused kernel --------------------------------
def _gpt_kernel(x_ref, tgt_ref, bias_ref, wte_ref,
                ln1_g_ref, ln1_b_ref, attn_w_ref, attn_b_ref,
                proj_w_ref, proj_b_ref, ln2_g_ref, ln2_b_ref,
                fc_w_ref, fc_b_ref, mproj_w_ref, mproj_b_ref,
                lnf_g_ref, lnf_b_ref,
                logits_ref, loss_ref,
                *, n_head, n_layer):
    x = x_ref[...].astype(jnp.float32)                 # (N, C) token-major slab
    n_tok, n_embd = x.shape
    head_dim = n_embd // n_head
    scale = 1.0 / math.sqrt(head_dim)
    attn_bias = bias_ref[...]                          # (N, N) 0 / -1e30

    for l in range(n_layer):
        # ---------------- attention block (LN1 + QKV + SDPA + proj + res) ---
        h = _layernorm(x, ln1_g_ref[l], ln1_b_ref[l])
        qkv = _mm(h, attn_w_ref[l]) + attn_b_ref[l]    # (N, 3C)
        proj_w = proj_w_ref[l]                         # (C, C)

        att = jnp.zeros_like(x)
        for hd in range(n_head):
            lo = hd * head_dim
            q = qkv[:, lo:lo + head_dim]                            # (N, D)
            k = qkv[:, n_embd + lo:n_embd + lo + head_dim]          # (N, D)
            v = qkv[:, 2 * n_embd + lo:2 * n_embd + lo + head_dim]  # (N, D)

            s = _mm_t(q, k) * scale + attn_bias                     # (N, N)
            m = jnp.max(s, axis=-1, keepdims=True)
            p = jnp.exp(s - m)
            p = p * pl.reciprocal(jnp.sum(p, axis=-1, keepdims=True),
                                  approx=True)
            y = _mm(p, v)                                           # (N, D)
            # fold the output projection in per-head: sum_h y_h @ W_proj[h]
            att = att + _mm(y, proj_w[lo:lo + head_dim, :])
        x = x + att + proj_b_ref[l]                                 # residual

        # ---------------- MLP block (LN2 + FC + GELU + proj + residual) -----
        h = _layernorm(x, ln2_g_ref[l], ln2_b_ref[l])
        h = _mm(h, fc_w_ref[l]) + fc_b_ref[l]                       # (N, 4C)
        h = 0.5 * h * (1.0 + jnp.tanh(GELU_C * (h + 0.044715 * h * h * h)))
        x = x + _mm(h, mproj_w_ref[l]) + mproj_b_ref[l]             # residual

    # --------- final LN + weight-tied lm_head (f32, no transposed copy) -----
    x = _layernorm(x, lnf_g_ref[...], lnf_b_ref[...])
    logits = lax.dot_general(x, wte_ref[...],
                             dimension_numbers=(((1,), (1,)), ((), ())),
                             preferred_element_type=jnp.float32)    # (N, V)
    logits_ref[...] = logits.astype(logits_ref.dtype)

    # --------- fused cross-entropy: int32 target indices, no one-hot --------
    m = jnp.max(logits, axis=-1, keepdims=True)
    lse = jnp.log(jnp.sum(jnp.exp(logits - m), axis=-1, keepdims=True)) + m
    vocab_ids = lax.broadcasted_iota(jnp.int32, logits.shape, 1)
    tgt_logit = jnp.sum(jnp.where(vocab_ids == tgt_ref[...], logits, 0.0),
                        axis=-1, keepdims=True)                     # (N, 1)
    total = jnp.sum(lse - tgt_logit, axis=0, keepdims=True)         # (1, 1)
    loss_ref[...] = jnp.broadcast_to(total * (1.0 / n_tok), loss_ref.shape)


# ------------------------------ glue helpers ---------------------------------
def _full_spec(arr):
    shape = tuple(arr.shape)
    zeros = (0,) * len(shape)
    return pl.BlockSpec(shape, lambda i, _z=zeros: _z)


def _attn_bias(batch, seq):
    """Block-diagonal causal additive mask over the (B*T, B*T) token grid."""
    n = batch * seq
    bias = np.full((n, n), NEG_BIG, np.float32)
    tril = np.tril(np.ones((seq, seq), np.float32))
    for b in range(batch):
        sl = slice(b * seq, (b + 1) * seq)
        bias[sl, sl] = np.where(tril > 0, 0.0, NEG_BIG)
    return jnp.asarray(bias)


# ------------------------------- forward -------------------------------------
def gpt_forward(params, idx, targets=None):
    B, T = idx.shape
    assert T <= BLOCK_SIZE
    N = B * T
    C = N_EMBD

    # Embedding gathers stay as plain-JAX glue (no clean Pallas gather win here).
    tok_emb = params["wte"][idx]                 # (B, T, C)
    pos_emb = params["wpe"][:T]                  # (T, C)
    x0 = (tok_emb + pos_emb[None, :, :]).reshape(N, C).astype(jnp.float32)

    if targets is not None:
        tgt = targets.reshape(N, 1).astype(jnp.int32)
    else:
        tgt = jnp.zeros((N, 1), jnp.int32)

    attn_bias = _attn_bias(B, T)                 # trace-time numpy constant

    kernel = functools.partial(_gpt_kernel, n_head=N_HEAD, n_layer=N_LAYER)

    inputs = (
        x0, tgt, attn_bias, params["wte"],
        params["ln1_g"], params["ln1_b"], params["attn_w"], params["attn_b"],
        params["proj_w"], params["proj_b"], params["ln2_g"], params["ln2_b"],
        params["fc_w"], params["fc_b"], params["mproj_w"], params["mproj_b"],
        params["lnf_g"], params["lnf_b"],
    )

    logits, loss_row = pl.pallas_call(
        kernel,
        grid=(1,),
        in_specs=[_full_spec(a) for a in inputs],
        out_specs=(
            pl.BlockSpec((N, VOCAB), lambda i: (0, 0)),
            pl.BlockSpec((1, 128), lambda i: (0, 0)),   # lane-dense loss row
        ),
        out_shape=(
            jax.ShapeDtypeStruct((N, VOCAB), jnp.float32),
            jax.ShapeDtypeStruct((1, 128), jnp.float32),
        ),
        compiler_params=pltpu.CompilerParams(
            dimension_semantics=("arbitrary",)),
    )(*inputs)

    loss = loss_row[0, 0] if targets is not None else None
    return logits.reshape(B, T, VOCAB), loss


# ------------------------------ parameters -----------------------------------
def init_params(key):
    std = 0.02
    proj_std = std * (2 * N_LAYER) ** (-0.5)     # NANOGPT_SCALE_INIT
    k = jax.random.split(key, 6)

    def nrm(kk, shape, s):
        return s * jax.random.normal(kk, shape, jnp.float32)

    L, C = N_LAYER, N_EMBD
    return {
        "wte": nrm(k[0], (VOCAB, C), std),
        "wpe": nrm(k[1], (BLOCK_SIZE, C), std),
        "ln1_g": jnp.ones((L, 1, C), jnp.float32),
        "ln1_b": jnp.zeros((L, 1, C), jnp.float32),
        "attn_w": nrm(k[2], (L, C, 3 * C), std),       # stored (in, out)
        "attn_b": jnp.zeros((L, 1, 3 * C), jnp.float32),
        "proj_w": nrm(k[3], (L, C, C), proj_std),
        "proj_b": jnp.zeros((L, 1, C), jnp.float32),
        "ln2_g": jnp.ones((L, 1, C), jnp.float32),
        "ln2_b": jnp.zeros((L, 1, C), jnp.float32),
        "fc_w": nrm(k[4], (L, C, 4 * C), std),
        "fc_b": jnp.zeros((L, 1, 4 * C), jnp.float32),
        "mproj_w": nrm(k[5], (L, 4 * C, C), proj_std),
        "mproj_b": jnp.zeros((L, 1, C), jnp.float32),
        "lnf_g": jnp.ones((1, C), jnp.float32),
        "lnf_b": jnp.zeros((1, C), jnp.float32),
    }


# --------------------------------- main ---------------------------------------
if __name__ == "__main__":
    key = jax.random.PRNGKey(0)
    pkey, ikey, tkey = jax.random.split(key, 3)

    params = init_params(pkey)
    idx = jax.random.randint(ikey, (BATCH, SEQ), 0, VOCAB, dtype=jnp.int32)
    targets = jax.random.randint(tkey, (BATCH, SEQ), 0, VOCAB, dtype=jnp.int32)

    fwd = jax.jit(gpt_forward)
    logits, loss = fwd(params, idx, targets)
    jax.block_until_ready((logits, loss))

    assert logits.shape == (BATCH, SEQ, VOCAB)
    assert loss.shape == ()
    assert bool(jnp.isfinite(loss))
    print("KERNEL_OK")
</pallas_src>

<mosaic_0001>
module attributes {stable_mosaic.version = 11 : i64} {
  func.func @_gpt_kernel(%arg0: i32, %arg1: memref<16x32xf32, #tpu.memory_space<vmem>>, %arg2: memref<16x1xi32, #tpu.memory_space<vmem>>, %arg3: memref<16x16xf32, #tpu.memory_space<vmem>>, %arg4: memref<128x32xf32, #tpu.memory_space<vmem>>, %arg5: memref<2x1x32xf32, #tpu.memory_space<vmem>>, %arg6: memref<2x1x32xf32, #tpu.memory_space<vmem>>, %arg7: memref<2x32x96xf32, #tpu.memory_space<vmem>>, %arg8: memref<2x1x96xf32, #tpu.memory_space<vmem>>, %arg9: memref<2x32x32xf32, #tpu.memory_space<vmem>>, %arg10: memref<2x1x32xf32, #tpu.memory_space<vmem>>, %arg11: memref<2x1x32xf32, #tpu.memory_space<vmem>>, %arg12: memref<2x1x32xf32, #tpu.memory_space<vmem>>, %arg13: memref<2x32x128xf32, #tpu.memory_space<vmem>>, %arg14: memref<2x1x128xf32, #tpu.memory_space<vmem>>, %arg15: memref<2x128x32xf32, #tpu.memory_space<vmem>>, %arg16: memref<2x1x32xf32, #tpu.memory_space<vmem>>, %arg17: memref<1x32xf32, #tpu.memory_space<vmem>>, %arg18: memref<1x32xf32, #tpu.memory_space<vmem>>, %arg19: memref<16x128xf32, #tpu.memory_space<vmem>>, %arg20: memref<1x128xf32, #tpu.memory_space<vmem>>) attributes {dimension_semantics = [#tpu.dimension_semantics<arbitrary>], iteration_bounds = array<i64: 1>, scalar_prefetch = 0 : i64, scratch_operands = 0 : i64, tpu.core_type = #tpu.core_type<tc>, window_params = [{pipeline_mode = #tpu.pipeline_mode<synchronous>, transform_indices = @transform_0, window_bounds = array<i64: 16, 32>}, {pipeline_mode = #tpu.pipeline_mode<synchronous>, transform_indices = @transform_1, window_bounds = array<i64: 16, 1>}, {pipeline_mode = #tpu.pipeline_mode<synchronous>, transform_indices = @transform_2, window_bounds = array<i64: 16, 16>}, {pipeline_mode = #tpu.pipeline_mode<synchronous>, transform_indices = @transform_3, window_bounds = array<i64: 128, 32>}, {pipeline_mode = #tpu.pipeline_mode<synchronous>, transform_indices = @transform_4, window_bounds = array<i64: 2, 1, 32>}, {pipeline_mode = #tpu.pipeline_mode<synchronous>, transform_indices = @transform_5, window_bounds = array<i64: 2, 1, 32>}, {pipeline_mode = #tpu.pipeline_mode<synchronous>, transform_indices = @transform_6, window_bounds = array<i64: 2, 32, 96>}, {pipeline_mode = #tpu.pipeline_mode<synchronous>, transform_indices = @transform_7, window_bounds = array<i64: 2, 1, 96>}, {pipeline_mode = #tpu.pipeline_mode<synchronous>, transform_indices = @transform_8, window_bounds = array<i64: 2, 32, 32>}, {pipeline_mode = #tpu.pipeline_mode<synchronous>, transform_indices = @transform_9, window_bounds = array<i64: 2, 1, 32>}, {pipeline_mode = #tpu.pipeline_mode<synchronous>, transform_indices = @transform_10, window_bounds = array<i64: 2, 1, 32>}, {pipeline_mode = #tpu.pipeline_mode<synchronous>, transform_indices = @transform_11, window_bounds = array<i64: 2, 1, 32>}, {pipeline_mode = #tpu.pipeline_mode<synchronous>, transform_indices = @transform_12, window_bounds = array<i64: 2, 32, 128>}, {pipeline_mode = #tpu.pipeline_mode<synchronous>, transform_indices = @transform_13, window_bounds = array<i64: 2, 1, 128>}, {pipeline_mode = #tpu.pipeline_mode<synchronous>, transform_indices = @transform_14, window_bounds = array<i64: 2, 128, 32>}, {pipeline_mode = #tpu.pipeline_mode<synchronous>, transform_indices = @transform_15, window_bounds = array<i64: 2, 1, 32>}, {pipeline_mode = #tpu.pipeline_mode<synchronous>, transform_indices = @transform_16, window_bounds = array<i64: 1, 32>}, {pipeline_mode = #tpu.pipeline_mode<synchronous>, transform_indices = @transform_17, window_bounds = array<i64: 1, 32>}, {pipeline_mode = #tpu.pipeline_mode<synchronous>, transform_indices = @transform_18, window_bounds = array<i64: 16, 128>}, {pipeline_mode = #tpu.pipeline_mode<synchronous>, transform_indices = @transform_19, window_bounds = array<i64: 1, 128>}]} {
    %c0 = arith.constant 0 : index
    %c0_0 = arith.constant 0 : index
    %0 = vector.load %arg1[%c0, %c0_0] : memref<16x32xf32, #tpu.memory_space<vmem>>, vector<16x32xf32>
    %c0_1 = arith.constant 0 : index
    %c0_2 = arith.constant 0 : index
    %1 = vector.load %arg3[%c0_1, %c0_2] : memref<16x16xf32, #tpu.memory_space<vmem>>, vector<16x16xf32>
    %c0_3 = arith.constant 0 : index
    %c0_4 = arith.constant 0 : index
    %c0_5 = arith.constant 0 : index
    %2 = vector.load %arg5[%c0_3, %c0_4, %c0_5] : memref<2x1x32xf32, #tpu.memory_space<vmem>>, vector<1x1x32xf32>
    %3 = vector.shape_cast %2 : vector<1x1x32xf32> to vector<1x32xf32>
    %c0_6 = arith.constant 0 : index
    %c0_7 = arith.constant 0 : index
    %c0_8 = arith.constant 0 : index
    %4 = vector.load %arg6[%c0_6, %c0_7, %c0_8] : memref<2x1x32xf32, #tpu.memory_space<vmem>>, vector<1x1x32xf32>
    %5 = vector.shape_cast %4 : vector<1x1x32xf32> to vector<1x32xf32>
    %cst = arith.constant dense<0.000000e+00> : vector<16xf32>
    %6 = vector.multi_reduction <add>, %0, %cst [1] : vector<16x32xf32> to vector<16xf32>
    %7 = vector.shape_cast %6 : vector<16xf32> to vector<16x1xf32>
    %cst_9 = arith.constant 3.200000e+01 : f32
    %8 = vector.broadcast %cst_9 : f32 to vector<16x1xf32>
    %9 = arith.divf %7, %8 : vector<16x1xf32>
    %10 = vector.broadcast %9 : vector<16x1xf32> to vector<16x32xf32>
    %11 = arith.subf %0, %10 : vector<16x32xf32>
    %12 = arith.mulf %11, %11 : vector<16x32xf32>
    %cst_10 = arith.constant dense<0.000000e+00> : vector<16xf32>
    %13 = vector.multi_reduction <add>, %12, %cst_10 [1] : vector<16x32xf32> to vector<16xf32>
    %14 = vector.shape_cast %13 : vector<16xf32> to vector<16x1xf32>
    %cst_11 = arith.constant 3.200000e+01 : f32
    %15 = vector.broadcast %cst_11 : f32 to vector<16x1xf32>
    %16 = arith.divf %14, %15 : vector<16x1xf32>
    %17 = vector.broadcast %9 : vector<16x1xf32> to vector<16x32xf32>
    %18 = arith.subf %0, %17 : vector<16x32xf32>
    %cst_12 = arith.constant 9.99999974E-6 : f32
    %19 = vector.broadcast %cst_12 : f32 to vector<16x1xf32>
    %20 = arith.addf %16, %19 : vector<16x1xf32>
    %21 = math.rsqrt %20 : vector<16x1xf32>
    %22 = vector.broadcast %21 : vector<16x1xf32> to vector<16x32xf32>
    %23 = arith.mulf %18, %22 : vector<16x32xf32>
    %24 = vector.broadcast %3 : vector<1x32xf32> to vector<16x32xf32>
    %25 = arith.mulf %23, %24 : vector<16x32xf32>
    %26 = vector.broadcast %5 : vector<1x32xf32> to vector<16x32xf32>
    %27 = arith.addf %25, %26 : vector<16x32xf32>
    %c0_13 = arith.constant 0 : index
    %c0_14 = arith.constant 0 : index
    %c0_15 = arith.constant 0 : index
    %28 = vector.load %arg7[%c0_13, %c0_14, %c0_15] : memref<2x32x96xf32, #tpu.memory_space<vmem>>, vector<1x32x96xf32>
    %29 = vector.shape_cast %28 : vector<1x32x96xf32> to vector<32x96xf32>
    %30 = arith.truncf %27 : vector<16x32xf32> to vector<16x32xbf16>
    %31 = arith.truncf %29 : vector<32x96xf32> to vector<32x96xbf16>
    %cst_16 = arith.constant dense<0.000000e+00> : vector<16x96xf32>
    %32 = tpu.matmul %30, %31, %cst_16 {dimension_numbers = #tpu.dot_dimension_numbers<[1], [0], [0], [1], [0, 0, 1, 1], [], []>} : vector<16x32xbf16>, vector<32x96xbf16>, vector<16x96xf32> -> vector<16x96xf32>
    %c0_17 = arith.constant 0 : index
    %c0_18 = arith.constant 0 : index
    %c0_19 = arith.constant 0 : index
    %33 = vector.load %arg8[%c0_17, %c0_18, %c0_19] : memref<2x1x96xf32, #tpu.memory_space<vmem>>, vector<1x1x96xf32>
    %34 = vector.shape_cast %33 : vector<1x1x96xf32> to vector<1x96xf32>
    %35 = vector.broadcast %34 : vector<1x96xf32> to vector<16x96xf32>
    %36 = arith.addf %32, %35 : vector<16x96xf32>
    %c0_20 = arith.constant 0 : index
    %c0_21 = arith.constant 0 : index
    %c0_22 = arith.constant 0 : index
    %37 = vector.load %arg9[%c0_20, %c0_21, %c0_22] : memref<2x32x32xf32, #tpu.memory_space<vmem>>, vector<1x32x32xf32>
    %38 = vector.shape_cast %37 : vector<1x32x32xf32> to vector<32x32xf32>
    %cst_23 = arith.constant 0.000000e+00 : f32
    %39 = vector.broadcast %cst_23 : f32 to vector<16x32xf32>
    %40 = vector.extract_strided_slice %36 {offsets = [0, 0], sizes = [16, 8], strides = [1, 1]} : vector<16x96xf32> to vector<16x8xf32>
    %41 = vector.extract_strided_slice %36 {offsets = [0, 32], sizes = [16, 8], strides = [1, 1]} : vector<16x96xf32> to vector<16x8xf32>
    %42 = vector.extract_strided_slice %36 {offsets = [0, 64], sizes = [16, 8], strides = [1, 1]} : vector<16x96xf32> to vector<16x8xf32>
    %43 = arith.truncf %40 : vector<16x8xf32> to vector<16x8xbf16>
    %44 = arith.truncf %41 : vector<16x8xf32> to vector<16x8xbf16>
    %cst_24 = arith.constant dense<0.000000e+00> : vector<16x16xf32>
    %45 = tpu.matmul %43, %44, %cst_24 {dimension_numbers = #tpu.dot_dimension_numbers<[1], [1], [0], [0], [0, 0, 1, 0], [], []>} : vector<16x8xbf16>, vector<16x8xbf16>, vector<16x16xf32> -> vector<16x16xf32>
    %cst_25 = arith.constant 0.353553385 : f32
    %46 = vector.broadcast %cst_25 : f32 to vector<16x16xf32>
    %47 = arith.mulf %45, %46 : vector<16x16xf32>
    %48 = arith.addf %47, %1 : vector<16x16xf32>
    %cst_26 = arith.constant dense<0xFF800000> : vector<16xf32>
    %49 = vector.multi_reduction <maximumf>, %48, %cst_26 [1] : vector<16x16xf32> to vector<16xf32>
    %50 = vector.shape_cast %49 : vector<16xf32> to vector<16x1xf32>
    %51 = vector.broadcast %50 : vector<16x1xf32> to vector<16x16xf32>
    %52 = arith.subf %48, %51 : vector<16x16xf32>
    %53 = math.exp %52 : vector<16x16xf32>
    %cst_27 = arith.constant dense<0.000000e+00> : vector<16xf32>
    %54 = vector.multi_reduction <add>, %53, %cst_27 [1] : vector<16x16xf32> to vector<16xf32>
    %55 = vector.shape_cast %54 : vector<16xf32> to vector<16x1xf32>
    %56 = tpu.reciprocal %55 {approx = true} : vector<16x1xf32> -> vector<16x1xf32>
    %57 = vector.broadcast %56 : vector<16x1xf32> to vector<16x16xf32>
    %58 = arith.mulf %53, %57 : vector<16x16xf32>
    %59 = arith.truncf %58 : vector<16x16xf32> to vector<16x16xbf16>
    %60 = arith.truncf %42 : vector<16x8xf32> to vector<16x8xbf16>
    %cst_28 = arith.constant dense<0.000000e+00> : vector<16x8xf32>
    %61 = tpu.matmul %59, %60, %cst_28 {dimension_numbers = #tpu.dot_dimension_numbers<[1], [0], [0], [1], [0, 0, 1, 1], [], []>} : vector<16x16xbf16>, vector<16x8xbf16>, vector<16x8xf32> -> vector<16x8xf32>
    %62 = vector.extract_strided_slice %38 {offsets = [0, 0], sizes = [8, 32], strides = [1, 1]} : vector<32x32xf32> to vector<8x32xf32>
    %63 = arith.truncf %61 : vector<16x8xf32> to vector<16x8xbf16>
    %64 = arith.truncf %62 : vector<8x32xf32> to vector<8x32xbf16>
    %cst_29 = arith.constant dense<0.000000e+00> : vector<16x32xf32>
    %65 = tpu.matmul %63, %64, %cst_29 {dimension_numbers = #tpu.dot_dimension_numbers<[1], [0], [0], [1], [0, 0, 1, 1], [], []>} : vector<16x8xbf16>, vector<8x32xbf16>, vector<16x32xf32> -> vector<16x32xf32>
    %66 = arith.addf %39, %65 : vector<16x32xf32>
    %67 = vector.extract_strided_slice %36 {offsets = [0, 8], sizes = [16, 8], strides = [1, 1]} : vector<16x96xf32> to vector<16x8xf32>
    %68 = vector.extract_strided_slice %36 {offsets = [0, 40], sizes = [16, 8], strides = [1, 1]} : vector<16x96xf32> to vector<16x8xf32>
    %69 = vector.extract_strided_slice %36 {offsets = [0, 72], sizes = [16, 8], strides = [1, 1]} : vector<16x96xf32> to vector<16x8xf32>
    %70 = arith.truncf %67 : vector<16x8xf32> to vector<16x8xbf16>
    %71 = arith.truncf %68 : vector<16x8xf32> to vector<16x8xbf16>
    %cst_30 = arith.constant dense<0.000000e+00> : vector<16x16xf32>
    %72 = tpu.matmul %70, %71, %cst_30 {dimension_numbers = #tpu.dot_dimension_numbers<[1], [1], [0], [0], [0, 0, 1, 0], [], []>} : vector<16x8xbf16>, vector<16x8xbf16>, vector<16x16xf32> -> vector<16x16xf32>
    %cst_31 = arith.constant 0.353553385 : f32
    %73 = vector.broadcast %cst_31 : f32 to vector<16x16xf32>
    %74 = arith.mulf %72, %73 : vector<16x16xf32>
    %75 = arith.addf %74, %1 : vector<16x16xf32>
    %cst_32 = arith.constant dense<0xFF800000> : vector<16xf32>
    %76 = vector.multi_reduction <maximumf>, %75, %cst_32 [1] : vector<16x16xf32> to vector<16xf32>
    %77 = vector.shape_cast %76 : vector<16xf32> to vector<16x1xf32>
    %78 = vector.broadcast %77 : vector<16x1xf32> to vector<16x16xf32>
    %79 = arith.subf %75, %78 : vector<16x16xf32>
    %80 = math.exp %79 : vector<16x16xf32>
    %cst_33 = arith.constant dense<0.000000e+00> : vector<16xf32>
    %81 = vector.multi_reduction <add>, %80, %cst_33 [1] : vector<16x16xf32> to vector<16xf32>
    %82 = vector.shape_cast %81 : vector<16xf32> to vector<16x1xf32>
    %83 = tpu.reciprocal %82 {approx = true} : vector<16x1xf32> -> vector<16x1xf32>
    %84 = vector.broadcast %83 : vector<16x1xf32> to vector<16x16xf32>
    %85 = arith.mulf %80, %84 : vector<16x16xf32>
    %86 = arith.truncf %85 : vector<16x16xf32> to vector<16x16xbf16>
    %87 = arith.truncf %69 : vector<16x8xf32> to vector<16x8xbf16>
    %cst_34 = arith.constant dense<0.000000e+00> : vector<16x8xf32>
    %88 = tpu.matmul %86, %87, %cst_34 {dimension_numbers = #tpu.dot_dimension_numbers<[1], [0], [0], [1], [0, 0, 1, 1], [], []>} : vector<16x16xbf16>, vector<16x8xbf16>, vector<16x8xf32> -> vector<16x8xf32>
    %89 = vector.extract_strided_slice %38 {offsets = [8, 0], sizes = [8, 32], strides = [1, 1]} : vector<32x32xf32> to vector<8x32xf32>
    %90 = arith.truncf %88 : vector<16x8xf32> to vector<16x8xbf16>
    %91 = arith.truncf %89 : vector<8x32xf32> to vector<8x32xbf16>
    %cst_35 = arith.constant dense<0.000000e+00> : vector<16x32xf32>
    %92 = tpu.matmul %90, %91, %cst_35 {dimension_numbers = #tpu.dot_dimension_numbers<[1], [0], [0], [1], [0, 0, 1, 1], [], []>} : vector<16x8xbf16>, vector<8x32xbf16>, vector<16x32xf32> -> vector<16x32xf32>
    %93 = arith.addf %66, %92 : vector<16x32xf32>
    %94 = vector.extract_strided_slice %36 {offsets = [0, 16], sizes = [16, 8], strides = [1, 1]} : vector<16x96xf32> to vector<16x8xf32>
    %95 = vector.extract_strided_slice %36 {offsets = [0, 48], sizes = [16, 8], strides = [1, 1]} : vector<16x96xf32> to vector<16x8xf32>
    %96 = vector.extract_strided_slice %36 {offsets = [0, 80], sizes = [16, 8], strides = [1, 1]} : vector<16x96xf32> to vector<16x8xf32>
    %97 = arith.truncf %94 : vector<16x8xf32> to vector<16x8xbf16>
    %98 = arith.truncf %95 : vector<16x8xf32> to vector<16x8xbf16>
    %cst_36 = arith.constant dense<0.000000e+00> : vector<16x16xf32>
    %99 = tpu.matmul %97, %98, %cst_36 {dimension_numbers = #tpu.dot_dimension_numbers<[1], [1], [0], [0], [0, 0, 1, 0], [], []>} : vector<16x8xbf16>, vector<16x8xbf16>, vector<16x16xf32> -> vector<16x16xf32>
    %cst_37 = arith.constant 0.353553385 : f32
    %100 = vector.broadcast %cst_37 : f32 to vector<16x16xf32>
    %101 = arith.mulf %99, %100 : vector<16x16xf32>
    %102 = arith.addf %101, %1 : vector<16x16xf32>
    %cst_38 = arith.constant dense<0xFF800000> : vector<16xf32>
    %103 = vector.multi_reduction <maximumf>, %102, %cst_38 [1] : vector<16x16xf32> to vector<16xf32>
    %104 = vector.shape_cast %103 : vector<16xf32> to vector<16x1xf32>
    %105 = vector.broadcast %104 : vector<16x1xf32> to vector<16x16xf32>
    %106 = arith.subf %102, %105 : vector<16x16xf32>
    %107 = math.exp %106 : vector<16x16xf32>
    %cst_39 = arith.constant dense<0.000000e+00> : vector<16xf32>
    %108 = vector.multi_reduction <add>, %107, %cst_39 [1] : vector<16x16xf32> to vector<16xf32>
    %109 = vector.shape_cast %108 : vector<16xf32> to vector<16x1xf32>
    %110 = tpu.reciprocal %109 {approx = true} : vector<16x1xf32> -> vector<16x1xf32>
    %111 = vector.broadcast %110 : vector<16x1xf32> to vector<16x16xf32>
    %112 = arith.mulf %107, %111 : vector<16x16xf32>
    %113 = arith.truncf %112 : vector<16x16xf32> to vector<16x16xbf16>
    %114 = arith.truncf %96 : vector<16x8xf32> to vector<16x8xbf16>
    %cst_40 = arith.constant dense<0.000000e+00> : vector<16x8xf32>
    %115 = tpu.matmul %113, %114, %cst_40 {dimension_numbers = #tpu.dot_dimension_numbers<[1], [0], [0], [1], [0, 0, 1, 1], [], []>} : vector<16x16xbf16>, vector<16x8xbf16>, vector<16x8xf32> -> vector<16x8xf32>
    %116 = vector.extract_strided_slice %38 {offsets = [16, 0], sizes = [8, 32], strides = [1, 1]} : vector<32x32xf32> to vector<8x32xf32>
    %117 = arith.truncf %115 : vector<16x8xf32> to vector<16x8xbf16>
    %118 = arith.truncf %116 : vector<8x32xf32> to vector<8x32xbf16>
    %cst_41 = arith.constant dense<0.000000e+00> : vector<16x32xf32>
    %119 = tpu.matmul %117, %118, %cst_41 {dimension_numbers = #tpu.dot_dimension_numbers<[1], [0], [0], [1], [0, 0, 1, 1], [], []>} : vector<16x8xbf16>, vector<8x32xbf16>, vector<16x32xf32> -> vector<16x32xf32>
    %120 = arith.addf %93, %119 : vector<16x32xf32>
    %121 = vector.extract_strided_slice %36 {offsets = [0, 24], sizes = [16, 8], strides = [1, 1]} : vector<16x96xf32> to vector<16x8xf32>
    %122 = vector.extract_strided_slice %36 {offsets = [0, 56], sizes = [16, 8], strides = [1, 1]} : vector<16x96xf32> to vector<16x8xf32>
    %123 = vector.extract_strided_slice %36 {offsets = [0, 88], sizes = [16, 8], strides = [1, 1]} : vector<16x96xf32> to vector<16x8xf32>
    %124 = arith.truncf %121 : vector<16x8xf32> to vector<16x8xbf16>
    %125 = arith.truncf %122 : vector<16x8xf32> to vector<16x8xbf16>
    %cst_42 = arith.constant dense<0.000000e+00> : vector<16x16xf32>
    %126 = tpu.matmul %124, %125, %cst_42 {dimension_numbers = #tpu.dot_dimension_numbers<[1], [1], [0], [0], [0, 0, 1, 0], [], []>} : vector<16x8xbf16>, vector<16x8xbf16>, vector<16x16xf32> -> vector<16x16xf32>
    %cst_43 = arith.constant 0.353553385 : f32
    %127 = vector.broadcast %cst_43 : f32 to vector<16x16xf32>
    %128 = arith.mulf %126, %127 : vector<16x16xf32>
    %129 = arith.addf %128, %1 : vector<16x16xf32>
    %cst_44 = arith.constant dense<0xFF800000> : vector<16xf32>
    %130 = vector.multi_reduction <maximumf>, %129, %cst_44 [1] : vector<16x16xf32> to vector<16xf32>
    %131 = vector.shape_cast %130 : vector<16xf32> to vector<16x1xf32>
    %132 = vector.broadcast %131 : vector<16x1xf32> to vector<16x16xf32>
    %133 = arith.subf %129, %132 : vector<16x16xf32>
    %134 = math.exp %133 : vector<16x16xf32>
    %cst_45 = arith.constant dense<0.000000e+00> : vector<16xf32>
    %135 = vector.multi_reduction <add>, %134, %cst_45 [1] : vector<16x16xf32> to vector<16xf32>
    %136 = vector.shape_cast %135 : vector<16xf32> to vector<16x1xf32>
    %137 = tpu.reciprocal %136 {approx = true} : vector<16x1xf32> -> vector<16x1xf32>
    %138 = vector.broadcast %137 : vector<16x1xf32> to vector<16x16xf32>
    %139 = arith.mulf %134, %138 : vector<16x16xf32>
    %140 = arith.truncf %139 : vector<16x16xf32> to vector<16x16xbf16>
    %141 = arith.truncf %123 : vector<16x8xf32> to vector<16x8xbf16>
    %cst_46 = arith.constant dense<0.000000e+00> : vector<16x8xf32>
    %142 = tpu.matmul %140, %141, %cst_46 {dimension_numbers = #tpu.dot_dimension_numbers<[1], [0], [0], [1], [0, 0, 1, 1], [], []>} : vector<16x16xbf16>, vector<16x8xbf16>, vector<16x8xf32> -> vector<16x8xf32>
    %143 = vector.extract_strided_slice %38 {offsets = [24, 0], sizes = [8, 32], strides = [1, 1]} : vector<32x32xf32> to vector<8x32xf32>
    %144 = arith.truncf %142 : vector<16x8xf32> to vector<16x8xbf16>
    %145 = arith.truncf %143 : vector<8x32xf32> to vector<8x32xbf16>
    %cst_47 = arith.constant dense<0.000000e+00> : vector<16x32xf32>
    %146 = tpu.matmul %144, %145, %cst_47 {dimension_numbers = #tpu.dot_dimension_numbers<[1], [0], [0], [1], [0, 0, 1, 1], [], []>} : vector<16x8xbf16>, vector<8x32xbf16>, vector<16x32xf32> -> vector<16x32xf32>
    %147 = arith.addf %120, %146 : vector<16x32xf32>
    %148 = arith.addf %0, %147 : vector<16x32xf32>
    %c0_48 = arith.constant 0 : index
    %c0_49 = arith.constant 0 : index
    %c0_50 = arith.constant 0 : index
    %149 = vector.load %arg10[%c0_48, %c0_49, %c0_50] : memref<2x1x32xf32, #tpu.memory_space<vmem>>, vector<1x1x32xf32>
    %150 = vector.shape_cast %149 : vector<1x1x32xf32> to vector<1x32xf32>
    %151 = vector.broadcast %150 : vector<1x32xf32> to vector<16x32xf32>
    %152 = arith.addf %148, %151 : vector<16x32xf32>
    %c0_51 = arith.constant 0 : index
    %c0_52 = arith.constant 0 : index
    %c0_53 = arith.constant 0 : index
    %153 = vector.load %arg11[%c0_51, %c0_52, %c0_53] : memref<2x1x32xf32, #tpu.memory_space<vmem>>, vector<1x1x32xf32>
    %154 = vector.shape_cast %153 : vector<1x1x32xf32> to vector<1x32xf32>
    %c0_54 = arith.constant 0 : index
    %c0_55 = arith.constant 0 : index
    %c0_56 = arith.constant 0 : index
    %155 = vector.load %arg12[%c0_54, %c0_55, %c0_56] : memref<2x1x32xf32, #tpu.memory_space<vmem>>, vector<1x1x32xf32>
    %156 = vector.shape_cast %155 : vector<1x1x32xf32> to vector<1x32xf32>
    %cst_57 = arith.constant dense<0.000000e+00> : vector<16xf32>
    %157 = vector.multi_reduction <add>, %152, %cst_57 [1] : vector<16x32xf32> to vector<16xf32>
    %158 = vector.shape_cast %157 : vector<16xf32> to vector<16x1xf32>
    %cst_58 = arith.constant 3.200000e+01 : f32
    %159 = vector.broadcast %cst_58 : f32 to vector<16x1xf32>
    %160 = arith.divf %158, %159 : vector<16x1xf32>
    %161 = vector.broadcast %160 : vector<16x1xf32> to vector<16x32xf32>
    %162 = arith.subf %152, %161 : vector<16x32xf32>
    %163 = arith.mulf %162, %162 : vector<16x32xf32>
    %cst_59 = arith.constant dense<0.000000e+00> : vector<16xf32>
    %164 = vector.multi_reduction <add>, %163, %cst_59 [1] : vector<16x32xf32> to vector<16xf32>
    %165 = vector.shape_cast %164 : vector<16xf32> to vector<16x1xf32>
    %cst_60 = arith.constant 3.200000e+01 : f32
    %166 = vector.broadcast %cst_60 : f32 to vector<16x1xf32>
    %167 = arith.divf %165, %166 : vector<16x1xf32>
    %168 = vector.broadcast %160 : vector<16x1xf32> to vector<16x32xf32>
    %169 = arith.subf %152, %168 : vector<16x32xf32>
    %cst_61 = arith.constant 9.99999974E-6 : f32
    %170 = vector.broadcast %cst_61 : f32 to vector<16x1xf32>
    %171 = arith.addf %167, %170 : vector<16x1xf32>
    %172 = math.rsqrt %171 : vector<16x1xf32>
    %173 = vector.broadcast %172 : vector<16x1xf32> to vector<16x32xf32>
    %174 = arith.mulf %169, %173 : vector<16x32xf32>
    %175 = vector.broadcast %154 : vector<1x32xf32> to vector<16x32xf32>
    %176 = arith.mulf %174, %175 : vector<16x32xf32>
    %177 = vector.broadcast %156 : vector<1x32xf32> to vector<16x32xf32>
    %178 = arith.addf %176, %177 : vector<16x32xf32>
    %c0_62 = arith.constant 0 : index
    %c0_63 = arith.constant 0 : index
    %c0_64 = arith.constant 0 : index
    %179 = vector.load %arg13[%c0_62, %c0_63, %c0_64] : memref<2x32x128xf32, #tpu.memory_space<vmem>>, vector<1x32x128xf32>
    %180 = vector.shape_cast %179 : vector<1x32x128xf32> to vector<32x128xf32>
    %181 = arith.truncf %178 : vector<16x32xf32> to vector<16x32xbf16>
    %182 = arith.truncf %180 : vector<32x128xf32> to vector<32x128xbf16>
    %cst_65 = arith.constant dense<0.000000e+00> : vector<16x128xf32>
    %183 = tpu.matmul %181, %182, %cst_65 {dimension_numbers = #tpu.dot_dimension_numbers<[1], [0], [0], [1], [0, 0, 1, 1], [], []>} : vector<16x32xbf16>, vector<32x128xbf16>, vector<16x128xf32> -> vector<16x128xf32>
    %c0_66 = arith.constant 0 : index
    %c0_67 = arith.constant 0 : index
    %c0_68 = arith.constant 0 : index
    %184 = vector.load %arg14[%c0_66, %c0_67, %c0_68] : memref<2x1x128xf32, #tpu.memory_space<vmem>>, vector<1x1x128xf32>
    %185 = vector.shape_cast %184 : vector<1x1x128xf32> to vector<1x128xf32>
    %186 = vector.broadcast %185 : vector<1x128xf32> to vector<16x128xf32>
    %187 = arith.addf %183, %186 : vector<16x128xf32>
    %cst_69 = arith.constant 5.000000e-01 : f32
    %188 = vector.broadcast %cst_69 : f32 to vector<16x128xf32>
    %189 = arith.mulf %188, %187 : vector<16x128xf32>
    %cst_70 = arith.constant 4.471500e-02 : f32
    %190 = vector.broadcast %cst_70 : f32 to vector<16x128xf32>
    %191 = arith.mulf %190, %187 : vector<16x128xf32>
    %192 = arith.mulf %191, %187 : vector<16x128xf32>
    %193 = arith.mulf %192, %187 : vector<16x128xf32>
    %194 = arith.addf %187, %193 : vector<16x128xf32>
    %cst_71 = arith.constant 0.797884583 : f32
    %195 = vector.broadcast %cst_71 : f32 to vector<16x128xf32>
    %196 = arith.mulf %195, %194 : vector<16x128xf32>
    %197 = math.tanh %196 : vector<16x128xf32>
    %cst_72 = arith.constant 1.000000e+00 : f32
    %198 = vector.broadcast %cst_72 : f32 to vector<16x128xf32>
    %199 = arith.addf %198, %197 : vector<16x128xf32>
    %200 = arith.mulf %189, %199 : vector<16x128xf32>
    %c0_73 = arith.constant 0 : index
    %c0_74 = arith.constant 0 : index
    %c0_75 = arith.constant 0 : index
    %201 = vector.load %arg15[%c0_73, %c0_74, %c0_75] : memref<2x128x32xf32, #tpu.memory_space<vmem>>, vector<1x128x32xf32>
    %202 = vector.shape_cast %201 : vector<1x128x32xf32> to vector<128x32xf32>
    %203 = arith.truncf %200 : vector<16x128xf32> to vector<16x128xbf16>
    %204 = arith.truncf %202 : vector<128x32xf32> to vector<128x32xbf16>
    %cst_76 = arith.constant dense<0.000000e+00> : vector<16x32xf32>
    %205 = tpu.matmul %203, %204, %cst_76 {dimension_numbers = #tpu.dot_dimension_numbers<[1], [0], [0], [1], [0, 0, 1, 1], [], []>} : vector<16x128xbf16>, vector<128x32xbf16>, vector<16x32xf32> -> vector<16x32xf32>
    %206 = arith.addf %152, %205 : vector<16x32xf32>
    %c0_77 = arith.constant 0 : index
    %c0_78 = arith.constant 0 : index
    %c0_79 = arith.constant 0 : index
    %207 = vector.load %arg16[%c0_77, %c0_78, %c0_79] : memref<2x1x32xf32, #tpu.memory_space<vmem>>, vector<1x1x32xf32>
    %208 = vector.shape_cast %207 : vector<1x1x32xf32> to vector<1x32xf32>
    %209 = vector.broadcast %208 : vector<1x32xf32> to vector<16x32xf32>
    %210 = arith.addf %206, %209 : vector<16x32xf32>
    %c1 = arith.constant 1 : index
    %c0_80 = arith.constant 0 : index
    %c0_81 = arith.constant 0 : index
    %211 = vector.load %arg5[%c1, %c0_80, %c0_81] : memref<2x1x32xf32, #tpu.memory_space<vmem>>, vector<1x1x32xf32>
    %212 = vector.shape_cast %211 : vector<1x1x32xf32> to vector<1x32xf32>
    %c1_82 = arith.constant 1 : index
    %c0_83 = arith.constant 0 : index
    %c0_84 = arith.constant 0 : index
    %213 = vector.load %arg6[%c1_82, %c0_83, %c0_84] : memref<2x1x32xf32, #tpu.memory_space<vmem>>, vector<1x1x32xf32>
    %214 = vector.shape_cast %213 : vector<1x1x32xf32> to vector<1x32xf32>
    %cst_85 = arith.constant dense<0.000000e+00> : vector<16xf32>
    %215 = vector.multi_reduction <add>, %210, %cst_85 [1] : vector<16x32xf32> to vector<16xf32>
    %216 = vector.shape_cast %215 : vector<16xf32> to vector<16x1xf32>
    %cst_86 = arith.constant 3.200000e+01 : f32
    %217 = vector.broadcast %cst_86 : f32 to vector<16x1xf32>
    %218 = arith.divf %216, %217 : vector<16x1xf32>
    %219 = vector.broadcast %218 : vector<16x1xf32> to vector<16x32xf32>
    %220 = arith.subf %210, %219 : vector<16x32xf32>
    %221 = arith.mulf %220, %220 : vector<16x32xf32>
    %cst_87 = arith.constant dense<0.000000e+00> : vector<16xf32>
    %222 = vector.multi_reduction <add>, %221, %cst_87 [1] : vector<16x32xf32> to vector<16xf32>
    %223 = vector.shape_cast %222 : vector<16xf32> to vector<16x1xf32>
    %cst_88 = arith.constant 3.200000e+01 : f32
    %224 = vector.broadcast %cst_88 : f32 to vector<16x1xf32>
    %225 = arith.divf %223, %224 : vector<16x1xf32>
    %226 = vector.broadcast %218 : vector<16x1xf32> to vector<16x32xf32>
    %227 = arith.subf %210, %226 : vector<16x32xf32>
    %cst_89 = arith.constant 9.99999974E-6 : f32
    %228 = vector.broadcast %cst_89 : f32 to vector<16x1xf32>
    %229 = arith.addf %225, %228 : vector<16x1xf32>
    %230 = math.rsqrt %229 : vector<16x1xf32>
    %231 = vector.broadcast %230 : vector<16x1xf32> to vector<16x32xf32>
    %232 = arith.mulf %227, %231 : vector<16x32xf32>
    %233 = vector.broadcast %212 : vector<1x32xf32> to vector<16x32xf32>
    %234 = arith.mulf %232, %233 : vector<16x32xf32>
    %235 = vector.broadcast %214 : vector<1x32xf32> to vector<16x32xf32>
    %236 = arith.addf %234, %235 : vector<16x32xf32>
    %c1_90 = arith.constant 1 : index
    %c0_91 = arith.constant 0 : index
    %c0_92 = arith.constant 0 : index
    %237 = vector.load %arg7[%c1_90, %c0_91, %c0_92] : memref<2x32x96xf32, #tpu.memory_space<vmem>>, vector<1x32x96xf32>
    %238 = vector.shape_cast %237 : vector<1x32x96xf32> to vector<32x96xf32>
    %239 = arith.truncf %236 : vector<16x32xf32> to vector<16x32xbf16>
    %240 = arith.truncf %238 : vector<32x96xf32> to vector<32x96xbf16>
    %cst_93 = arith.constant dense<0.000000e+00> : vector<16x96xf32>
    %241 = tpu.matmul %239, %240, %cst_93 {dimension_numbers = #tpu.dot_dimension_numbers<[1], [0], [0], [1], [0, 0, 1, 1], [], []>} : vector<16x32xbf16>, vector<32x96xbf16>, vector<16x96xf32> -> vector<16x96xf32>
    %c1_94 = arith.constant 1 : index
    %c0_95 = arith.constant 0 : index
    %c0_96 = arith.constant 0 : index
    %242 = vector.load %arg8[%c1_94, %c0_95, %c0_96] : memref<2x1x96xf32, #tpu.memory_space<vmem>>, vector<1x1x96xf32>
    %243 = vector.shape_cast %242 : vector<1x1x96xf32> to vector<1x96xf32>
    %244 = vector.broadcast %243 : vector<1x96xf32> to vector<16x96xf32>
    %245 = arith.addf %241, %244 : vector<16x96xf32>
    %c1_97 = arith.constant 1 : index
    %c0_98 = arith.constant 0 : index
    %c0_99 = arith.constant 0 : index
    %246 = vector.load %arg9[%c1_97, %c0_98, %c0_99] : memref<2x32x32xf32, #tpu.memory_space<vmem>>, vector<1x32x32xf32>
    %247 = vector.shape_cast %246 : vector<1x32x32xf32> to vector<32x32xf32>
    %cst_100 = arith.constant 0.000000e+00 : f32
    %248 = vector.broadcast %cst_100 : f32 to vector<16x32xf32>
    %249 = vector.extract_strided_slice %245 {offsets = [0, 0], sizes = [16, 8], strides = [1, 1]} : vector<16x96xf32> to vector<16x8xf32>
    %250 = vector.extract_strided_slice %245 {offsets = [0, 32], sizes = [16, 8], strides = [1, 1]} : vector<16x96xf32> to vector<16x8xf32>
    %251 = vector.extract_strided_slice %245 {offsets = [0, 64], sizes = [16, 8], strides = [1, 1]} : vector<16x96xf32> to vector<16x8xf32>
    %252 = arith.truncf %249 : vector<16x8xf32> to vector<16x8xbf16>
    %253 = arith.truncf %250 : vector<16x8xf32> to vector<16x8xbf16>
    %cst_101 = arith.constant dense<0.000000e+00> : vector<16x16xf32>
    %254 = tpu.matmul %252, %253, %cst_101 {dimension_numbers = #tpu.dot_dimension_numbers<[1], [1], [0], [0], [0, 0, 1, 0], [], []>} : vector<16x8xbf16>, vector<16x8xbf16>, vector<16x16xf32> -> vector<16x16xf32>
    %cst_102 = arith.constant 0.353553385 : f32
    %255 = vector.broadcast %cst_102 : f32 to vector<16x16xf32>
    %256 = arith.mulf %254, %255 : vector<16x16xf32>
    %257 = arith.addf %256, %1 : vector<16x16xf32>
    %cst_103 = arith.constant dense<0xFF800000> : vector<16xf32>
    %258 = vector.multi_reduction <maximumf>, %257, %cst_103 [1] : vector<16x16xf32> to vector<16xf32>
    %259 = vector.shape_cast %258 : vector<16xf32> to vector<16x1xf32>
    %260 = vector.broadcast %259 : vector<16x1xf32> to vector<16x16xf32>
    %261 = arith.subf %257, %260 : vector<16x16xf32>
    %262 = math.exp %261 : vector<16x16xf32>
    %cst_104 = arith.constant dense<0.000000e+00> : vector<16xf32>
    %263 = vector.multi_reduction <add>, %262, %cst_104 [1] : vector<16x16xf32> to vector<16xf32>
    %264 = vector.shape_cast %263 : vector<16xf32> to vector<16x1xf32>
    %265 = tpu.reciprocal %264 {approx = true} : vector<16x1xf32> -> vector<16x1xf32>
    %266 = vector.broadcast %265 : vector<16x1xf32> to vector<16x16xf32>
    %267 = arith.mulf %262, %266 : vector<16x16xf32>
    %268 = arith.truncf %267 : vector<16x16xf32> to vector<16x16xbf16>
    %269 = arith.truncf %251 : vector<16x8xf32> to vector<16x8xbf16>
    %cst_105 = arith.constant dense<0.000000e+00> : vector<16x8xf32>
    %270 = tpu.matmul %268, %269, %cst_105 {dimension_numbers = #tpu.dot_dimension_numbers<[1], [0], [0], [1], [0, 0, 1, 1], [], []>} : vector<16x16xbf16>, vector<16x8xbf16>, vector<16x8xf32> -> vector<16x8xf32>
    %271 = vector.extract_strided_slice %247 {offsets = [0, 0], sizes = [8, 32], strides = [1, 1]} : vector<32x32xf32> to vector<8x32xf32>
    %272 = arith.truncf %270 : vector<16x8xf32> to vector<16x8xbf16>
    %273 = arith.truncf %271 : vector<8x32xf32> to vector<8x32xbf16>
    %cst_106 = arith.constant dense<0.000000e+00> : vector<16x32xf32>
    %274 = tpu.matmul %272, %273, %cst_106 {dimension_numbers = #tpu.dot_dimension_numbers<[1], [0], [0], [1], [0, 0, 1, 1], [], []>} : vector<16x8xbf16>, vector<8x32xbf16>, vector<16x32xf32> -> vector<16x32xf32>
    %275 = arith.addf %248, %274 : vector<16x32xf32>
    %276 = vector.extract_strided_slice %245 {offsets = [0, 8], sizes = [16, 8], strides = [1, 1]} : vector<16x96xf32> to vector<16x8xf32>
    %277 = vector.extract_strided_slice %245 {offsets = [0, 40], sizes = [16, 8], strides = [1, 1]} : vector<16x96xf32> to vector<16x8xf32>
    %278 = vector.extract_strided_slice %245 {offsets = [0, 72], sizes = [16, 8], strides = [1, 1]} : vector<16x96xf32> to vector<16x8xf32>
    %279 = arith.truncf %276 : vector<16x8xf32> to vector<16x8xbf16>
    %280 = arith.truncf %277 : vector<16x8xf32> to vector<16x8xbf16>
    %cst_107 = arith.constant dense<0.000000e+00> : vector<16x16xf32>
    %281 = tpu.matmul %279, %280, %cst_107 {dimension_numbers = #tpu.dot_dimension_numbers<[1], [1], [0], [0], [0, 0, 1, 0], [], []>} : vector<16x8xbf16>, vector<16x8xbf16>, vector<16x16xf32> -> vector<16x16xf32>
    %cst_108 = arith.constant 0.353553385 : f32
    %282 = vector.broadcast %cst_108 : f32 to vector<16x16xf32>
    %283 = arith.mulf %281, %282 : vector<16x16xf32>
    %284 = arith.addf %283, %1 : vector<16x16xf32>
    %cst_109 = arith.constant dense<0xFF800000> : vector<16xf32>
    %285 = vector.multi_reduction <maximumf>, %284, %cst_109 [1] : vector<16x16xf32> to vector<16xf32>
    %286 = vector.shape_cast %285 : vector<16xf32> to vector<16x1xf32>
    %287 = vector.broadcast %286 : vector<16x1xf32> to vector<16x16xf32>
    %288 = arith.subf %284, %287 : vector<16x16xf32>
    %289 = math.exp %288 : vector<16x16xf32>
    %cst_110 = arith.constant dense<0.000000e+00> : vector<16xf32>
    %290 = vector.multi_reduction <add>, %289, %cst_110 [1] : vector<16x16xf32> to vector<16xf32>
    %291 = vector.shape_cast %290 : vector<16xf32> to vector<16x1xf32>
    %292 = tpu.reciprocal %291 {approx = true} : vector<16x1xf32> -> vector<16x1xf32>
    %293 = vector.broadcast %292 : vector<16x1xf32> to vector<16x16xf32>
    %294 = arith.mulf %289, %293 : vector<16x16xf32>
    %295 = arith.truncf %294 : vector<16x16xf32> to vector<16x16xbf16>
    %296 = arith.truncf %278 : vector<16x8xf32> to vector<16x8xbf16>
    %cst_111 = arith.constant dense<0.000000e+00> : vector<16x8xf32>
    %297 = tpu.matmul %295, %296, %cst_111 {dimension_numbers = #tpu.dot_dimension_numbers<[1], [0], [0], [1], [0, 0, 1, 1], [], []>} : vector<16x16xbf16>, vector<16x8xbf16>, vector<16x8xf32> -> vector<16x8xf32>
    %298 = vector.extract_strided_slice %247 {offsets = [8, 0], sizes = [8, 32], strides = [1, 1]} : vector<32x32xf32> to vector<8x32xf32>
    %299 = arith.truncf %297 : vector<16x8xf32> to vector<16x8xbf16>
    %300 = arith.truncf %298 : vector<8x32xf32> to vector<8x32xbf16>
    %cst_112 = arith.constant dense<0.000000e+00> : vector<16x32xf32>
    %301 = tpu.matmul %299, %300, %cst_112 {dimension_numbers = #tpu.dot_dimension_numbers<[1], [0], [0], [1], [0, 0, 1, 1], [], []>} : vector<16x8xbf16>, vector<8x32xbf16>, vector<16x32xf32> -> vector<16x32xf32>
    %302 = arith.addf %275, %301 : vector<16x32xf32>
    %303 = vector.extract_strided_slice %245 {offsets = [0, 16], sizes = [16, 8], strides = [1, 1]} : vector<16x96xf32> to vector<16x8xf32>
    %304 = vector.extract_strided_slice %245 {offsets = [0, 48], sizes = [16, 8], strides = [1, 1]} : vector<16x96xf32> to vector<16x8xf32>
    %305 = vector.extract_strided_slice %245 {offsets = [0, 80], sizes = [16, 8], strides = [1, 1]} : vector<16x96xf32> to vector<16x8xf32>
    %306 = arith.truncf %303 : vector<16x8xf32> to vector<16x8xbf16>
    %307 = arith.truncf %304 : vector<16x8xf32> to vector<16x8xbf16>
    %cst_113 = arith.constant dense<0.000000e+00> : vector<16x16xf32>
    %308 = tpu.matmul %306, %307, %cst_113 {dimension_numbers = #tpu.dot_dimension_numbers<[1], [1], [0], [0], [0, 0, 1, 0], [], []>} : vector<16x8xbf16>, vector<16x8xbf16>, vector<16x16xf32> -> vector<16x16xf32>
    %cst_114 = arith.constant 0.353553385 : f32
    %309 = vector.broadcast %cst_114 : f32 to vector<16x16xf32>
    %310 = arith.mulf %308, %309 : vector<16x16xf32>
    %311 = arith.addf %310, %1 : vector<16x16xf32>
    %cst_115 = arith.constant dense<0xFF800000> : vector<16xf32>
    %312 = vector.multi_reduction <maximumf>, %311, %cst_115 [1] : vector<16x16xf32> to vector<16xf32>
    %313 = vector.shape_cast %312 : vector<16xf32> to vector<16x1xf32>
    %314 = vector.broadcast %313 : vector<16x1xf32> to vector<16x16xf32>
    %315 = arith.subf %311, %314 : vector<16x16xf32>
    %316 = math.exp %315 : vector<16x16xf32>
    %cst_116 = arith.constant dense<0.000000e+00> : vector<16xf32>
    %317 = vector.multi_reduction <add>, %316, %cst_116 [1] : vector<16x16xf32> to vector<16xf32>
    %318 = vector.shape_cast %317 : vector<16xf32> to vector<16x1xf32>
    %319 = tpu.reciprocal %318 {approx = true} : vector<16x1xf32> -> vector<16x1xf32>
    %320 = vector.broadcast %319 : vector<16x1xf32> to vector<16x16xf32>
    %321 = arith.mulf %316, %320 : vector<16x16xf32>
    %322 = arith.truncf %321 : vector<16x16xf32> to vector<16x16xbf16>
    %323 = arith.truncf %305 : vector<16x8xf32> to vector<16x8xbf16>
    %cst_117 = arith.constant dense<0.000000e+00> : vector<16x8xf32>
    %324 = tpu.matmul %322, %323, %cst_117 {dimension_numbers = #tpu.dot_dimension_numbers<[1], [0], [0], [1], [0, 0, 1, 1], [], []>} : vector<16x16xbf16>, vector<16x8xbf16>, vector<16x8xf32> -> vector<16x8xf32>
    %325 = vector.extract_strided_slice %247 {offsets = [16, 0], sizes = [8, 32], strides = [1, 1]} : vector<32x32xf32> to vector<8x32xf32>
    %326 = arith.truncf %324 : vector<16x8xf32> to vector<16x8xbf16>
    %327 = arith.truncf %325 : vector<8x32xf32> to vector<8x32xbf16>
    %cst_118 = arith.constant dense<0.000000e+00> : vector<16x32xf32>
    %328 = tpu.matmul %326, %327, %cst_118 {dimension_numbers = #tpu.dot_dimension_numbers<[1], [0], [0], [1], [0, 0, 1, 1], [], []>} : vector<16x8xbf16>, vector<8x32xbf16>, vector<16x32xf32> -> vector<16x32xf32>
    %329 = arith.addf %302, %328 : vector<16x32xf32>
    %330 = vector.extract_strided_slice %245 {offsets = [0, 24], sizes = [16, 8], strides = [1, 1]} : vector<16x96xf32> to vector<16x8xf32>
    %331 = vector.extract_strided_slice %245 {offsets = [0, 56], sizes = [16, 8], strides = [1, 1]} : vector<16x96xf32> to vector<16x8xf32>
    %332 = vector.extract_strided_slice %245 {offsets = [0, 88], sizes = [16, 8], strides = [1, 1]} : vector<16x96xf32> to vector<16x8xf32>
    %333 = arith.truncf %330 : vector<16x8xf32> to vector<16x8xbf16>
    %334 = arith.truncf %331 : vector<16x8xf32> to vector<16x8xbf16>
    %cst_119 = arith.constant dense<0.000000e+00> : vector<16x16xf32>
    %335 = tpu.matmul %333, %334, %cst_119 {dimension_numbers = #tpu.dot_dimension_numbers<[1], [1], [0], [0], [0, 0, 1, 0], [], []>} : vector<16x8xbf16>, vector<16x8xbf16>, vector<16x16xf32> -> vector<16x16xf32>
    %cst_120 = arith.constant 0.353553385 : f32
    %336 = vector.broadcast %cst_120 : f32 to vector<16x16xf32>
    %337 = arith.mulf %335, %336 : vector<16x16xf32>
    %338 = arith.addf %337, %1 : vector<16x16xf32>
    %cst_121 = arith.constant dense<0xFF800000> : vector<16xf32>
    %339 = vector.multi_reduction <maximumf>, %338, %cst_121 [1] : vector<16x16xf32> to vector<16xf32>
    %340 = vector.shape_cast %339 : vector<16xf32> to vector<16x1xf32>
    %341 = vector.broadcast %340 : vector<16x1xf32> to vector<16x16xf32>
    %342 = arith.subf %338, %341 : vector<16x16xf32>
    %343 = math.exp %342 : vector<16x16xf32>
    %cst_122 = arith.constant dense<0.000000e+00> : vector<16xf32>
    %344 = vector.multi_reduction <add>, %343, %cst_122 [1] : vector<16x16xf32> to vector<16xf32>
    %345 = vector.shape_cast %344 : vector<16xf32> to vector<16x1xf32>
    %346 = tpu.reciprocal %345 {approx = true} : vector<16x1xf32> -> vector<16x1xf32>
    %347 = vector.broadcast %346 : vector<16x1xf32> to vector<16x16xf32>
    %348 = arith.mulf %343, %347 : vector<16x16xf32>
    %349 = arith.truncf %348 : vector<16x16xf32> to vector<16x16xbf16>
    %350 = arith.truncf %332 : vector<16x8xf32> to vector<16x8xbf16>
    %cst_123 = arith.constant dense<0.000000e+00> : vector<16x8xf32>
    %351 = tpu.matmul %349, %350, %cst_123 {dimension_numbers = #tpu.dot_dimension_numbers<[1], [0], [0], [1], [0, 0, 1, 1], [], []>} : vector<16x16xbf16>, vector<16x8xbf16>, vector<16x8xf32> -> vector<16x8xf32>
    %352 = vector.extract_strided_slice %247 {offsets = [24, 0], sizes = [8, 32], strides = [1, 1]} : vector<32x32xf32> to vector<8x32xf32>
    %353 = arith.truncf %351 : vector<16x8xf32> to vector<16x8xbf16>
    %354 = arith.truncf %352 : vector<8x32xf32> to vector<8x32xbf16>
    %cst_124 = arith.constant dense<0.000000e+00> : vector<16x32xf32>
    %355 = tpu.matmul %353, %354, %cst_124 {dimension_numbers = #tpu.dot_dimension_numbers<[1], [0], [0], [1], [0, 0, 1, 1], [], []>} : vector<16x8xbf16>, vector<8x32xbf16>, vector<16x32xf32> -> vector<16x32xf32>
    %356 = arith.addf %329, %355 : vector<16x32xf32>
    %357 = arith.addf %210, %356 : vector<16x32xf32>
    %c1_125 = arith.constant 1 : index
    %c0_126 = arith.constant 0 : index
    %c0_127 = arith.constant 0 : index
    %358 = vector.load %arg10[%c1_125, %c0_126, %c0_127] : memref<2x1x32xf32, #tpu.memory_space<vmem>>, vector<1x1x32xf32>
    %359 = vector.shape_cast %358 : vector<1x1x32xf32> to vector<1x32xf32>
    %360 = vector.broadcast %359 : vector<1x32xf32> to vector<16x32xf32>
    %361 = arith.addf %357, %360 : vector<16x32xf32>
    %c1_128 = arith.constant 1 : index
    %c0_129 = arith.constant 0 : index
    %c0_130 = arith.constant 0 : index
    %362 = vector.load %arg11[%c1_128, %c0_129, %c0_130] : memref<2x1x32xf32, #tpu.memory_space<vmem>>, vector<1x1x32xf32>
    %363 = vector.shape_cast %362 : vector<1x1x32xf32> to vector<1x32xf32>
    %c1_131 = arith.constant 1 : index
    %c0_132 = arith.constant 0 : index
    %c0_133 = arith.constant 0 : index
    %364 = vector.load %arg12[%c1_131, %c0_132, %c0_133] : memref<2x1x32xf32, #tpu.memory_space<vmem>>, vector<1x1x32xf32>
    %365 = vector.shape_cast %364 : vector<1x1x32xf32> to vector<1x32xf32>
    %cst_134 = arith.constant dense<0.000000e+00> : vector<16xf32>
    %366 = vector.multi_reduction <add>, %361, %cst_134 [1] : vector<16x32xf32> to vector<16xf32>
    %367 = vector.shape_cast %366 : vector<16xf32> to vector<16x1xf32>
    %cst_135 = arith.constant 3.200000e+01 : f32
    %368 = vector.broadcast %cst_135 : f32 to vector<16x1xf32>
    %369 = arith.divf %367, %368 : vector<16x1xf32>
    %370 = vector.broadcast %369 : vector<16x1xf32> to vector<16x32xf32>
    %371 = arith.subf %361, %370 : vector<16x32xf32>
    %372 = arith.mulf %371, %371 : vector<16x32xf32>
    %cst_136 = arith.constant dense<0.000000e+00> : vector<16xf32>
    %373 = vector.multi_reduction <add>, %372, %cst_136 [1] : vector<16x32xf32> to vector<16xf32>
    %374 = vector.shape_cast %373 : vector<16xf32> to vector<16x1xf32>
    %cst_137 = arith.constant 3.200000e+01 : f32
    %375 = vector.broadcast %cst_137 : f32 to vector<16x1xf32>
    %376 = arith.divf %374, %375 : vector<16x1xf32>
    %377 = vector.broadcast %369 : vector<16x1xf32> to vector<16x32xf32>
    %378 = arith.subf %361, %377 : vector<16x32xf32>
    %cst_138 = arith.constant 9.99999974E-6 : f32
    %379 = vector.broadcast %cst_138 : f32 to vector<16x1xf32>
    %380 = arith.addf %376, %379 : vector<16x1xf32>
    %381 = math.rsqrt %380 : vector<16x1xf32>
    %382 = vector.broadcast %381 : vector<16x1xf32> to vector<16x32xf32>
    %383 = arith.mulf %378, %382 : vector<16x32xf32>
    %384 = vector.broadcast %363 : vector<1x32xf32> to vector<16x32xf32>
    %385 = arith.mulf %383, %384 : vector<16x32xf32>
    %386 = vector.broadcast %365 : vector<1x32xf32> to vector<16x32xf32>
    %387 = arith.addf %385, %386 : vector<16x32xf32>
    %c1_139 = arith.constant 1 : index
    %c0_140 = arith.constant 0 : index
    %c0_141 = arith.constant 0 : index
    %388 = vector.load %arg13[%c1_139, %c0_140, %c0_141] : memref<2x32x128xf32, #tpu.memory_space<vmem>>, vector<1x32x128xf32>
    %389 = vector.shape_cast %388 : vector<1x32x128xf32> to vector<32x128xf32>
    %390 = arith.truncf %387 : vector<16x32xf32> to vector<16x32xbf16>
    %391 = arith.truncf %389 : vector<32x128xf32> to vector<32x128xbf16>
    %cst_142 = arith.constant dense<0.000000e+00> : vector<16x128xf32>
    %392 = tpu.matmul %390, %391, %cst_142 {dimension_numbers = #tpu.dot_dimension_numbers<[1], [0], [0], [1], [0, 0, 1, 1], [], []>} : vector<16x32xbf16>, vector<32x128xbf16>, vector<16x128xf32> -> vector<16x128xf32>
    %c1_143 = arith.constant 1 : index
    %c0_144 = arith.constant 0 : index
    %c0_145 = arith.constant 0 : index
    %393 = vector.load %arg14[%c1_143, %c0_144, %c0_145] : memref<2x1x128xf32, #tpu.memory_space<vmem>>, vector<1x1x128xf32>
    %394 = vector.shape_cast %393 : vector<1x1x128xf32> to vector<1x128xf32>
    %395 = vector.broadcast %394 : vector<1x128xf32> to vector<16x128xf32>
    %396 = arith.addf %392, %395 : vector<16x128xf32>
    %cst_146 = arith.constant 5.000000e-01 : f32
    %397 = vector.broadcast %cst_146 : f32 to vector<16x128xf32>
    %398 = arith.mulf %397, %396 : vector<16x128xf32>
    %cst_147 = arith.constant 4.471500e-02 : f32
    %399 = vector.broadcast %cst_147 : f32 to vector<16x128xf32>
    %400 = arith.mulf %399, %396 : vector<16x128xf32>
    %401 = arith.mulf %400, %396 : vector<16x128xf32>
    %402 = arith.mulf %401, %396 : vector<16x128xf32>
    %403 = arith.addf %396, %402 : vector<16x128xf32>
    %cst_148 = arith.constant 0.797884583 : f32
    %404 = vector.broadcast %cst_148 : f32 to vector<16x128xf32>
    %405 = arith.mulf %404, %403 : vector<16x128xf32>
    %406 = math.tanh %405 : vector<16x128xf32>
    %cst_149 = arith.constant 1.000000e+00 : f32
    %407 = vector.broadcast %cst_149 : f32 to vector<16x128xf32>
    %408 = arith.addf %407, %406 : vector<16x128xf32>
    %409 = arith.mulf %398, %408 : vector<16x128xf32>
    %c1_150 = arith.constant 1 : index
    %c0_151 = arith.constant 0 : index
    %c0_152 = arith.constant 0 : index
    %410 = vector.load %arg15[%c1_150, %c0_151, %c0_152] : memref<2x128x32xf32, #tpu.memory_space<vmem>>, vector<1x128x32xf32>
    %411 = vector.shape_cast %410 : vector<1x128x32xf32> to vector<128x32xf32>
    %412 = arith.truncf %409 : vector<16x128xf32> to vector<16x128xbf16>
    %413 = arith.truncf %411 : vector<128x32xf32> to vector<128x32xbf16>
    %cst_153 = arith.constant dense<0.000000e+00> : vector<16x32xf32>
    %414 = tpu.matmul %412, %413, %cst_153 {dimension_numbers = #tpu.dot_dimension_numbers<[1], [0], [0], [1], [0, 0, 1, 1], [], []>} : vector<16x128xbf16>, vector<128x32xbf16>, vector<16x32xf32> -> vector<16x32xf32>
    %415 = arith.addf %361, %414 : vector<16x32xf32>
    %c1_154 = arith.constant 1 : index
    %c0_155 = arith.constant 0 : index
    %c0_156 = arith.constant 0 : index
    %416 = vector.load %arg16[%c1_154, %c0_155, %c0_156] : memref<2x1x32xf32, #tpu.memory_space<vmem>>, vector<1x1x32xf32>
    %417 = vector.shape_cast %416 : vector<1x1x32xf32> to vector<1x32xf32>
    %418 = vector.broadcast %417 : vector<1x32xf32> to vector<16x32xf32>
    %419 = arith.addf %415, %418 : vector<16x32xf32>
    %c0_157 = arith.constant 0 : index
    %c0_158 = arith.constant 0 : index
    %420 = vector.load %arg17[%c0_157, %c0_158] : memref<1x32xf32, #tpu.memory_space<vmem>>, vector<1x32xf32>
    %c0_159 = arith.constant 0 : index
    %c0_160 = arith.constant 0 : index
    %421 = vector.load %arg18[%c0_159, %c0_160] : memref<1x32xf32, #tpu.memory_space<vmem>>, vector<1x32xf32>
    %cst_161 = arith.constant dense<0.000000e+00> : vector<16xf32>
    %422 = vector.multi_reduction <add>, %419, %cst_161 [1] : vector<16x32xf32> to vector<16xf32>
    %423 = vector.shape_cast %422 : vector<16xf32> to vector<16x1xf32>
    %cst_162 = arith.constant 3.200000e+01 : f32
    %424 = vector.broadcast %cst_162 : f32 to vector<16x1xf32>
    %425 = arith.divf %423, %424 : vector<16x1xf32>
    %426 = vector.broadcast %425 : vector<16x1xf32> to vector<16x32xf32>
    %427 = arith.subf %419, %426 : vector<16x32xf32>
    %428 = arith.mulf %427, %427 : vector<16x32xf32>
    %cst_163 = arith.constant dense<0.000000e+00> : vector<16xf32>
    %429 = vector.multi_reduction <add>, %428, %cst_163 [1] : vector<16x32xf32> to vector<16xf32>
    %430 = vector.shape_cast %429 : vector<16xf32> to vector<16x1xf32>
    %cst_164 = arith.constant 3.200000e+01 : f32
    %431 = vector.broadcast %cst_164 : f32 to vector<16x1xf32>
    %432 = arith.divf %430, %431 : vector<16x1xf32>
    %433 = vector.broadcast %425 : vector<16x1xf32> to vector<16x32xf32>
    %434 = arith.subf %419, %433 : vector<16x32xf32>
    %cst_165 = arith.constant 9.99999974E-6 : f32
    %435 = vector.broadcast %cst_165 : f32 to vector<16x1xf32>
    %436 = arith.addf %432, %435 : vector<16x1xf32>
    %437 = math.rsqrt %436 : vector<16x1xf32>
    %438 = vector.broadcast %437 : vector<16x1xf32> to vector<16x32xf32>
    %439 = arith.mulf %434, %438 : vector<16x32xf32>
    %440 = vector.broadcast %420 : vector<1x32xf32> to vector<16x32xf32>
    %441 = arith.mulf %439, %440 : vector<16x32xf32>
    %442 = vector.broadcast %421 : vector<1x32xf32> to vector<16x32xf32>
    %443 = arith.addf %441, %442 : vector<16x32xf32>
    %c0_166 = arith.constant 0 : index
    %c0_167 = arith.constant 0 : index
    %444 = vector.load %arg4[%c0_166, %c0_167] : memref<128x32xf32, #tpu.memory_space<vmem>>, vector<128x32xf32>
    %cst_168 = arith.constant dense<0.000000e+00> : vector<16x128xf32>
    %445 = tpu.matmul %443, %444, %cst_168 {dimension_numbers = #tpu.dot_dimension_numbers<[1], [1], [0], [0], [0, 0, 1, 0], [], []>} : vector<16x32xf32>, vector<128x32xf32>, vector<16x128xf32> -> vector<16x128xf32>
    %c0_169 = arith.constant 0 : index
    %c0_170 = arith.constant 0 : index
    %446 = vector.load %arg19[%c0_169, %c0_170] : memref<16x128xf32, #tpu.memory_space<vmem>>, vector<16x128xf32>
    tpu.vector_store %arg19[%c0_169, %c0_170], %445 {strides = array<i32>} : memref<16x128xf32, #tpu.memory_space<vmem>>, vector<16x128xf32>,
    %cst_171 = arith.constant dense<0xFF800000> : vector<16xf32>
    %447 = vector.multi_reduction <maximumf>, %445, %cst_171 [1] : vector<16x128xf32> to vector<16xf32>
    %448 = vector.shape_cast %447 : vector<16xf32> to vector<16x1xf32>
    %449 = vector.broadcast %448 : vector<16x1xf32> to vector<16x128xf32>
    %450 = arith.subf %445, %449 : vector<16x128xf32>
    %451 = math.exp %450 : vector<16x128xf32>
    %cst_172 = arith.constant dense<0.000000e+00> : vector<16xf32>
    %452 = vector.multi_reduction <add>, %451, %cst_172 [1] : vector<16x128xf32> to vector<16xf32>
    %453 = vector.shape_cast %452 : vector<16xf32> to vector<16x1xf32>
    %454 = math.log %453 : vector<16x1xf32>
    %455 = arith.addf %454, %448 : vector<16x1xf32>
    %456 = tpu.iota {dimensions = array<i32: 1>} : vector<16x128xi32>
    %c0_173 = arith.constant 0 : index
    %c0_174 = arith.constant 0 : index
    %457 = vector.load %arg2[%c0_173, %c0_174] : memref<16x1xi32, #tpu.memory_space<vmem>>, vector<16x1xi32>
    %458 = vector.broadcast %457 : vector<16x1xi32> to vector<16x128xi32>
    %459 = arith.cmpi eq, %456, %458 : vector<16x128xi32>
    %cst_175 = arith.constant 0.000000e+00 : f32
    %460 = vector.broadcast %cst_175 : f32 to vector<16x128xf32>
    %461 = arith.select %459, %445, %460 : vector<16x128xi1>, vector<16x128xf32>
    %cst_176 = arith.constant dense<0.000000e+00> : vector<16xf32>
    %462 = vector.multi_reduction <add>, %461, %cst_176 [1] : vector<16x128xf32> to vector<16xf32>
    %463 = vector.shape_cast %462 : vector<16xf32> to vector<16x1xf32>
    %464 = arith.subf %455, %463 : vector<16x1xf32>
    %cst_177 = arith.constant dense<0.000000e+00> : vector<1xf32>
    %465 = vector.multi_reduction <add>, %464, %cst_177 [0] : vector<16x1xf32> to vector<1xf32>
    %466 = vector.shape_cast %465 : vector<1xf32> to vector<1x1xf32>
    %cst_178 = arith.constant 6.250000e-02 : f32
    %467 = vector.broadcast %cst_178 : f32 to vector<1x1xf32>
    %468 = arith.mulf %466, %467 : vector<1x1xf32>
    %469 = vector.shape_cast %468 : vector<1x1xf32> to vector<1x1xf32>
    %470 = vector.broadcast %469 : vector<1x1xf32> to vector<1x128xf32>
    %c0_179 = arith.constant 0 : index
    %c0_180 = arith.constant 0 : index
    %471 = vector.load %arg20[%c0_179, %c0_180] : memref<1x128xf32, #tpu.memory_space<vmem>>, vector<1x128xf32>
    tpu.vector_store %arg20[%c0_179, %c0_180], %470 {strides = array<i32>} : memref<1x128xf32, #tpu.memory_space<vmem>>, vector<1x128xf32>,
    return
  }
  func.func @transform_0(%arg0: i32) -> (i32, i32) {
    %c0_i32 = arith.constant 0 : i32
    %c0_i32_0 = arith.constant 0 : i32
    %c0_i32_1 = arith.constant 0 : i32
    return %c0_i32, %c0_i32_0 : i32, i32
  }
  func.func @transform_1(%arg0: i32) -> (i32, i32) {
    %c0_i32 = arith.constant 0 : i32
    %c0_i32_0 = arith.constant 0 : i32
    %c0_i32_1 = arith.constant 0 : i32
    return %c0_i32, %c0_i32_0 : i32, i32
  }
  func.func @transform_2(%arg0: i32) -> (i32, i32) {
    %c0_i32 = arith.constant 0 : i32
    %c0_i32_0 = arith.constant 0 : i32
    %c0_i32_1 = arith.constant 0 : i32
    return %c0_i32, %c0_i32_0 : i32, i32
  }
  func.func @transform_3(%arg0: i32) -> (i32, i32) {
    %c0_i32 = arith.constant 0 : i32
    %c0_i32_0 = arith.constant 0 : i32
    %c0_i32_1 = arith.constant 0 : i32
    return %c0_i32, %c0_i32_0 : i32, i32
  }
  func.func @transform_4(%arg0: i32) -> (i32, i32, i32) {
    %c0_i32 = arith.constant 0 : i32
    %c0_i32_0 = arith.constant 0 : i32
    %c0_i32_1 = arith.constant 0 : i32
    %c0_i32_2 = arith.constant 0 : i32
    return %c0_i32, %c0_i32_0, %c0_i32_1 : i32, i32, i32
  }
  func.func @transform_5(%arg0: i32) -> (i32, i32, i32) {
    %c0_i32 = arith.constant 0 : i32
    %c0_i32_0 = arith.constant 0 : i32
    %c0_i32_1 = arith.constant 0 : i32
    %c0_i32_2 = arith.constant 0 : i32
    return %c0_i32, %c0_i32_0, %c0_i32_1 : i32, i32, i32
  }
  func.func @transform_6(%arg0: i32) -> (i32, i32, i32) {
    %c0_i32 = arith.constant 0 : i32
    %c0_i32_0 = arith.constant 0 : i32
    %c0_i32_1 = arith.constant 0 : i32
    %c0_i32_2 = arith.constant 0 : i32
    return %c0_i32, %c0_i32_0, %c0_i32_1 : i32, i32, i32
  }
  func.func @transform_7(%arg0: i32) -> (i32, i32, i32) {
    %c0_i32 = arith.constant 0 : i32
    %c0_i32_0 = arith.constant 0 : i32
    %c0_i32_1 = arith.constant 0 : i32
    %c0_i32_2 = arith.constant 0 : i32
    return %c0_i32, %c0_i32_0, %c0_i32_1 : i32, i32, i32
  }
  func.func @transform_8(%arg0: i32) -> (i32, i32, i32) {
    %c0_i32 = arith.constant 0 : i32
    %c0_i32_0 = arith.constant 0 : i32
    %c0_i32_1 = arith.constant 0 : i32
    %c0_i32_2 = arith.constant 0 : i32
    return %c0_i32, %c0_i32_0, %c0_i32_1 : i32, i32, i32
  }
  func.func @transform_9(%arg0: i32) -> (i32, i32, i32) {
    %c0_i32 = arith.constant 0 : i32
    %c0_i32_0 = arith.constant 0 : i32
    %c0_i32_1 = arith.constant 0 : i32
    %c0_i32_2 = arith.constant 0 : i32
    return %c0_i32, %c0_i32_0, %c0_i32_1 : i32, i32, i32
  }
  func.func @transform_10(%arg0: i32) -> (i32, i32, i32) {
    %c0_i32 = arith.constant 0 : i32
    %c0_i32_0 = arith.constant 0 : i32
    %c0_i32_1 = arith.constant 0 : i32
    %c0_i32_2 = arith.constant 0 : i32
    return %c0_i32, %c0_i32_0, %c0_i32_1 : i32, i32, i32
  }
  func.func @transform_11(%arg0: i32) -> (i32, i32, i32) {
    %c0_i32 = arith.constant 0 : i32
    %c0_i32_0 = arith.constant 0 : i32
    %c0_i32_1 = arith.constant 0 : i32
    %c0_i32_2 = arith.constant 0 : i32
    return %c0_i32, %c0_i32_0, %c0_i32_1 : i32, i32, i32
  }
  func.func @transform_12(%arg0: i32) -> (i32, i32, i32) {
    %c0_i32 = arith.constant 0 : i32
    %c0_i32_0 = arith.constant 0 : i32
    %c0_i32_1 = arith.constant 0 : i32
    %c0_i32_2 = arith.constant 0 : i32
    return %c0_i32, %c0_i32_0, %c0_i32_1 : i32, i32, i32
  }
  func.func @transform_13(%arg0: i32) -> (i32, i32, i32) {
    %c0_i32 = arith.constant 0 : i32
    %c0_i32_0 = arith.constant 0 : i32
    %c0_i32_1 = arith.constant 0 : i32
    %c0_i32_2 = arith.constant 0 : i32
    return %c0_i32, %c0_i32_0, %c0_i32_1 : i32, i32, i32
  }
  func.func @transform_14(%arg0: i32) -> (i32, i32, i32) {
    %c0_i32 = arith.constant 0 : i32
    %c0_i32_0 = arith.constant 0 : i32
    %c0_i32_1 = arith.constant 0 : i32
    %c0_i32_2 = arith.constant 0 : i32
    return %c0_i32, %c0_i32_0, %c0_i32_1 : i32, i32, i32
  }
  func.func @transform_15(%arg0: i32) -> (i32, i32, i32) {
    %c0_i32 = arith.constant 0 : i32
    %c0_i32_0 = arith.constant 0 : i32
    %c0_i32_1 = arith.constant 0 : i32
    %c0_i32_2 = arith.constant 0 : i32
    return %c0_i32, %c0_i32_0, %c0_i32_1 : i32, i32, i32
  }
  func.func @transform_16(%arg0: i32) -> (i32, i32) {
    %c0_i32 = arith.constant 0 : i32
    %c0_i32_0 = arith.constant 0 : i32
    %c0_i32_1 = arith.constant 0 : i32
    return %c0_i32, %c0_i32_0 : i32, i32
  }
  func.func @transform_17(%arg0: i32) -> (i32, i32) {
    %c0_i32 = arith.constant 0 : i32
    %c0_i32_0 = arith.constant 0 : i32
    %c0_i32_1 = arith.constant 0 : i32
    return %c0_i32, %c0_i32_0 : i32, i32
  }
  func.func @transform_18(%arg0: i32) -> (i32, i32) {
    %c0_i32 = arith.constant 0 : i32
    %c0_i32_0 = arith.constant 0 : i32
    %c0_i32_1 = arith.constant 0 : i32
    return %c0_i32, %c0_i32_0 : i32, i32
  }
  func.func @transform_19(%arg0: i32) -> (i32, i32) {
    %c0_i32 = arith.constant 0 : i32
    %c0_i32_0 = arith.constant 0 : i32
    %c0_i32_1 = arith.constant 0 : i32
    return %c0_i32, %c0_i32_0 : i32, i32
  }
}

</mosaic_0001>

<llo_original>
// kernel: gpt_forward.1
$region0: #{gpt_forward.1}
  #allocation0 [shape = 'u32[]', space=smem, size = 0x4, offset = 0x4, fixed_abs, tag = 'smem constant byte address 0x4 - core index']
  #allocation1 [shape = 'u32[72,128]{1,0:T(1,128)}', space=vmem, size = 0x9000, scoped, tag = 'internal scratch']
  %s0 = inlined_call_operand.vmem [shape: f32[16,32], index: 0, kind: input, shape index: {}]
  %s1 = inlined_call_operand.vmem [shape: s32[16,1], index: 1, kind: input, shape index: {}]
  %s2 = inlined_call_operand.vmem [shape: f32[16,16], index: 2, kind: input, shape index: {}]
  %s3 = inlined_call_operand.vmem [shape: f32[128,32], index: 3, kind: input, shape index: {}]
  %s4 = inlined_call_operand.vmem [shape: f32[2,1,32], index: 4, kind: input, shape index: {}]
  %s5 = inlined_call_operand.vmem [shape: f32[2,1,32], index: 5, kind: input, shape index: {}]
  %s6 = inlined_call_operand.vmem [shape: f32[2,32,96], index: 6, kind: input, shape index: {}]
  %s7 = inlined_call_operand.vmem [shape: f32[2,1,96], index: 7, kind: input, shape index: {}]
  %s8 = inlined_call_operand.vmem [shape: f32[2,32,32], index: 8, kind: input, shape index: {}]
  %s9 = inlined_call_operand.vmem [shape: f32[2,1,32], index: 9, kind: input, shape index: {}]
  %s10 = inlined_call_operand.vmem [shape: f32[2,1,32], index: 10, kind: input, shape index: {}]
  %s11 = inlined_call_operand.vmem [shape: f32[2,1,32], index: 11, kind: input, shape index: {}]
  %s12 = inlined_call_operand.vmem [shape: f32[2,32,128], index: 12, kind: input, shape index: {}]
  %s13 = inlined_call_operand.vmem [shape: f32[2,1,128], index: 13, kind: input, shape index: {}]
  %s14 = inlined_call_operand.vmem [shape: f32[2,128,32], index: 14, kind: input, shape index: {}]
  %s15 = inlined_call_operand.vmem [shape: f32[2,1,32], index: 15, kind: input, shape index: {}]
  %s16 = inlined_call_operand.vmem [shape: f32[1,32], index: 16, kind: input, shape index: {}]
  %s17 = inlined_call_operand.vmem [shape: f32[1,32], index: 17, kind: input, shape index: {}]
  %s18 = inlined_call_operand.hbm [shape: f32[16,128], index: 18, kind: output, shape index: {0}]
  %s19 = inlined_call_operand.hbm [shape: f32[1,128], index: 19, kind: output, shape index: {1}]
  %20 = xla_tuple %s18, %s19
  %s21 = sld [smem:[#allocation0]]
  $region90: #{gpt_forward.1} parent=0
    _
  %s23 = ssub.s32 1, %s21
  %s24 = scalar_select 0, %s23, %s21
  $region1: #{gpt_forward.1} parent=0
    #allocation2 [shape = 'u8[8192]{0}', space=vmem, size = 0x2000, scoped, tag = 'output window, operand 0, single buffered']
    #allocation3 [shape = 's32[1]{0}', space=sflag, size = 0x4, scoped, tag = 'scoped memory for gpt_forward.1']
    #allocation4 [shape = 'u8[512]{0}', space=vmem, size = 0x400, scoped, tag = 'output window, operand 1, single buffered']
    #allocation5 [shape = 's32[1]{0}', space=sflag, size = 0x4, scoped, tag = 'scoped memory for gpt_forward.1']
    %25 = vsyncpa [#allocation3], 0
    %26 = vsyncpa [#allocation5], 0
    // Predicated region
    $region2: #{gpt_forward.1} parent=1 // pred_check
      _
    $region3: #{gpt_forward.1} parent=1 // pred_check_branch
      %28 = sbr.rel (0) target = $region5
    $region4: #{gpt_forward.1} parent=1 // pred_region
      _
    $region5: #{gpt_forward.1} parent=1 // pred_fallthru
      _
    // Predicated region
    $region6: #{gpt_forward.1} parent=1 // pred_check
      _
    $region7: #{gpt_forward.1} parent=1 // pred_check_branch
      %30 = sbr.rel (0) target = $region9
    $region8: #{gpt_forward.1} parent=1 // pred_region
      _
    $region9: #{gpt_forward.1} parent=1 // pred_fallthru
      _
    // Predicated region
    $region10: #{gpt_forward.1} parent=1 // pred_check
      _
    $region11: #{gpt_forward.1} parent=1 // pred_check_branch
      %32 = sbr.rel (0) target = $region13
    $region12: #{gpt_forward.1} parent=1 // pred_region
      _
    $region13: #{gpt_forward.1} parent=1 // pred_fallthru
      _
    // Predicated region
    $region14: #{gpt_forward.1} parent=1 // pred_check
      _
    $region15: #{gpt_forward.1} parent=1 // pred_check_branch
      %34 = sbr.rel (0) target = $region17
    $region16: #{gpt_forward.1} parent=1 // pred_region
      _
    $region17: #{gpt_forward.1} parent=1 // pred_fallthru
      _
    // Predicated region
    $region18: #{gpt_forward.1} parent=1 // pred_check
      _
    $region19: #{gpt_forward.1} parent=1 // pred_check_branch
      %36 = sbr.rel (0) target = $region21
    $region20: #{gpt_forward.1} parent=1 // pred_region
      _
    $region21: #{gpt_forward.1} parent=1 // pred_fallthru
      _
    // Predicated region
    $region22: #{gpt_forward.1} parent=1 // pred_check
      _
    $region23: #{gpt_forward.1} parent=1 // pred_check_branch
      %38 = sbr.rel (0) target = $region25
    $region24: #{gpt_forward.1} parent=1 // pred_region
      _
    $region25: #{gpt_forward.1} parent=1 // pred_fallthru
      _
    // Predicated region
    $region26: #{gpt_forward.1} parent=1 // pred_check
      _
    $region27: #{gpt_forward.1} parent=1 // pred_check_branch
      %40 = sbr.rel (0) target = $region29
    $region28: #{gpt_forward.1} parent=1 // pred_region
      _
    $region29: #{gpt_forward.1} parent=1 // pred_fallthru
      _
    // Predicated region
    $region30: #{gpt_forward.1} parent=1 // pred_check
      _
    $region31: #{gpt_forward.1} parent=1 // pred_check_branch
      %42 = sbr.rel (0) target = $region33
    $region32: #{gpt_forward.1} parent=1 // pred_region
      _
    $region33: #{gpt_forward.1} parent=1 // pred_fallthru
      _
    // Predicated region
    $region34: #{gpt_forward.1} parent=1 // pred_check
      _
    $region35: #{gpt_forward.1} parent=1 // pred_check_branch
      %44 = sbr.rel (0) target = $region37
    $region36: #{gpt_forward.1} parent=1 // pred_region
      _
    $region37: #{gpt_forward.1} parent=1 // pred_fallthru
      _
    // Predicated region
    $region38: #{gpt_forward.1} parent=1 // pred_check
      _
    $region39: #{gpt_forward.1} parent=1 // pred_check_branch
      %46 = sbr.rel (0) target = $region41
    $region40: #{gpt_forward.1} parent=1 // pred_region
      _
    $region41: #{gpt_forward.1} parent=1 // pred_fallthru
      _
    // Predicated region
    $region42: #{gpt_forward.1} parent=1 // pred_check
      _
    $region43: #{gpt_forward.1} parent=1 // pred_check_branch
      %48 = sbr.rel (0) target = $region45
    $region44: #{gpt_forward.1} parent=1 // pred_region
      _
    $region45: #{gpt_forward.1} parent=1 // pred_fallthru
      _
    // Predicated region
    $region46: #{gpt_forward.1} parent=1 // pred_check
      _
    $region47: #{gpt_forward.1} parent=1 // pred_check_branch
      %50 = sbr.rel (0) target = $region49
    $region48: #{gpt_forward.1} parent=1 // pred_region
      _
    $region49: #{gpt_forward.1} parent=1 // pred_fallthru
      _
    // Predicated region
    $region50: #{gpt_forward.1} parent=1 // pred_check
      _
    $region51: #{gpt_forward.1} parent=1 // pred_check_branch
      %52 = sbr.rel (0) target = $region53
    $region52: #{gpt_forward.1} parent=1 // pred_region
      _
    $region53: #{gpt_forward.1} parent=1 // pred_fallthru
      _
    // Predicated region
    $region54: #{gpt_forward.1} parent=1 // pred_check
      _
    $region55: #{gpt_forward.1} parent=1 // pred_check_branch
      %54 = sbr.rel (0) target = $region57
    $region56: #{gpt_forward.1} parent=1 // pred_region
      _
    $region57: #{gpt_forward.1} parent=1 // pred_fallthru
      _
    // Predicated region
    $region58: #{gpt_forward.1} parent=1 // pred_check
      _
    $region59: #{gpt_forward.1} parent=1 // pred_check_branch
      %56 = sbr.rel (0) target = $region61
    $region60: #{gpt_forward.1} parent=1 // pred_region
      _
    $region61: #{gpt_forward.1} parent=1 // pred_fallthru
      _
    // Predicated region
    $region62: #{gpt_forward.1} parent=1 // pred_check
      _
    $region63: #{gpt_forward.1} parent=1 // pred_check_branch
      %58 = sbr.rel (0) target = $region65
    $region64: #{gpt_forward.1} parent=1 // pred_region
      _
    $region65: #{gpt_forward.1} parent=1 // pred_fallthru
      _
    // Predicated region
    $region66: #{gpt_forward.1} parent=1 // pred_check
      _
    $region67: #{gpt_forward.1} parent=1 // pred_check_branch
      %60 = sbr.rel (0) target = $region69
    $region68: #{gpt_forward.1} parent=1 // pred_region
      _
    $region69: #{gpt_forward.1} parent=1 // pred_fallthru
      _
    // Predicated region
    $region70: #{gpt_forward.1} parent=1 // pred_check
      _
    $region71: #{gpt_forward.1} parent=1 // pred_check_branch
      %62 = sbr.rel (0) target = $region73
    $region72: #{gpt_forward.1} parent=1 // pred_region
      _
    $region73: #{gpt_forward.1} parent=1 // pred_fallthru
      _
    %v64 = vld [vmem:[%s0] sm:$0xff]
    %v65 = vld [vmem:[%s0 + $0x8] sm:$0xff]
    %v66 = vld [vmem:[%s2] sm:$0xff]
    %v67 = vld [vmem:[%s2 + $0x8] sm:$0xff]
    %v68 = vld [vmem:[%s4] sm:$0x1]
    %v69 = vld [vmem:[%s5] sm:$0x1]
    %vm70 = vcmask 261120
    %v71 = vsel %vm70, %v64, 0.0
    %72 = vadd.xlane.f32.xlu0 %v71
    %v73 = vpop.xlane.xlu0 %72
    %v74 = vsel %vm70, %v65, 0.0
    %75 = vadd.xlane.f32.xlu0 %v74
    %v76 = vpop.xlane.xlu0 %75
    %v77 = vrcp.pop 32.0
    %v78 = vmul.f32 32.0, %v77
    %v79 = vsub.f32 1.0, %v78
    %v80 = vmul.f32 %v77, %v79
    %v81 = vadd.f32 %v77, %v80
    %vm82 = vweird.f32 %v77
    %v83 = vsel %vm82, %v77, %v81
    %v84 = vmul.f32 %v73, %v83
    %v85 = vmul.f32 %v76, %v83
    %v86 = vsub.f32 %v64, %v84
    %v87 = vsub.f32 %v65, %v85
    %v88 = vmul.f32 %v86, %v86
    %v89 = vmul.f32 %v87, %v87
    %v90 = vsel %vm70, %v88, 0.0
    %91 = vadd.xlane.f32.xlu0 %v90
    %v92 = vpop.xlane.xlu0 %91
    %v93 = vsel %vm70, %v89, 0.0
    %94 = vadd.xlane.f32.xlu0 %v93
    %v95 = vpop.xlane.xlu0 %94
    %v96 = vmul.f32 %v92, %v83
    %v97 = vmul.f32 %v95, %v83
    %v98 = vadd.f32 %v96, 1e-05
    %v99 = vadd.f32 %v97, 1e-05
    %v100 = vrsqrt.pop %v98
    %v101 = vmul.f32 %v100, %v98
    %v102 = vmul.f32 %v101, %v100
    %v103 = vmul.f32 0.5, %v102
    %v104 = vsub.f32 1.5, %v103
    %v105 = vmul.f32 %v100, %v104
    %vm106 = vweird.f32 %v98
    %vm107 = vweird.f32 %v100
    %vm108 = vmor %vm106, %vm107
    %v109 = vsel %vm108, %v100, %v105
    %v110 = vrsqrt.pop %v99
    %v111 = vmul.f32 %v110, %v99
    %v112 = vmul.f32 %v111, %v110
    %v113 = vmul.f32 0.5, %v112
    %v114 = vsub.f32 1.5, %v113
    %v115 = vmul.f32 %v110, %v114
    %vm116 = vweird.f32 %v99
    %vm117 = vweird.f32 %v110
    %vm118 = vmor %vm116, %vm117
    %v119 = vsel %vm118, %v110, %v115
    %v120 = vmul.f32 %v86, %v109
    %v121 = vmul.f32 %v87, %v119
    %v123 = vperm.slane %v68, 0
    %v125 = vmul.f32 %v120, %v123
    %v126 = vmul.f32 %v121, %v123
    %v128 = vperm.slane %v69, 0
    %v130 = vadd.f32 %v125, %v128
    %v131 = vadd.f32 %v126, %v128
    %v132 = vld [vmem:[%s6] sm:$0xff]
    %v133 = vld [vmem:[%s6 + $0x8] sm:$0xff]
    %v134 = vld [vmem:[%s6 + $0x10] sm:$0xff]
    %v135 = vld [vmem:[%s6 + $0x18] sm:$0xff]
    %v136 = vpack.c.bf16 %v131, %v130
    %v137 = vpack.c.bf16 %v133, %v132
    %v138 = vpack.c.bf16 %v135, %v134
    %v139 = vld [vmem:[%s7] sm:$0x1]
    %v141 = vperm.slane %v139, 0
    %v144 = vsel %vm70, %v136, 0
    %146 = vmatpush.bf16.msra.mxu0 0
    %147 = vmatpush.bf16.msra.mxu0 0
    %148 = vmatpush.bf16.msra.mxu0 0
    %149 = vmatpush.bf16.msra.mxu0 0
    %150 = vmatpush.bf16.msra.mxu0 0
    %151 = vmatpush.bf16.msra.mxu0 0
    %152 = vmatpush.bf16.msra.mxu0 %v138
    %153 = vmatpush.bf16.msra.mxu0 %v137
    %154 = vmatmul.bf16.gmra.mxu0 %v144
    %v155 = vpop.f32.mrf.mxu0
    %v156 = vadd.f32 %v141, %v155
    %v157 = vpop.f32.mrf.mxu0
    %v158 = vadd.f32 %v141, %v157
    %159 = vdwg.mxu0
    %v160 = vld [vmem:[%s8] sm:$0xff]
    %v161 = vld [vmem:[%s8 + $0x8] sm:$0xff]
    %v162 = vld [vmem:[%s8 + $0x10] sm:$0xff]
    %v163 = vld [vmem:[%s8 + $0x18] sm:$0xff]
    %v164 = vpack.c.bf16 %v158, %v156
    %166 = vrot.lane.b32.xlu0 %v164, 96
    %v167 = vpop.permute.xlu0 %166
    %vm168 = vcmask 64512
    %v170 = vsel %vm168, %v164, 0
    %v173 = vsel %vm168, %v167, 0
    %175 = vmatpush.bf16.xpose.msra.mxu0 0
    %176 = vmatpush.bf16.xpose.msra.mxu0 0
    %177 = vmatpush.bf16.xpose.msra.mxu0 0
    %178 = vmatpush.bf16.xpose.msra.mxu0 0
    %179 = vmatpush.bf16.xpose.msra.mxu0 0
    %180 = vmatpush.bf16.xpose.msra.mxu0 0
    %181 = vmatpush.bf16.xpose.msra.mxu0 0
    %182 = vmatpush.bf16.xpose.msra.mxu0 %v173
    %183 = vmatmul.bf16.gmra.mxu0 %v170
    %v184 = vpop.f32.mrf.mxu0
    %v185 = vadd.f32 0.0, %v184
    %v186 = vpop.f32.mrf.mxu0
    %v187 = vadd.f32 0.0, %v186
    %188 = vdwg.mxu0
    %v189 = vmul.f32 %v185, 0.35355338
    %v190 = vmul.f32 %v187, 0.35355338
    %v191 = vadd.f32 %v189, %v66
    %v192 = vadd.f32 %v190, %v67
    %vm193 = vcmask 130048
    %v194 = vsel %vm193, %v191, -inf
    %195 = vmax.xlane.f32.xlu0 %v194
    %v196 = vpop.xlane.xlu0 %195
    %v197 = vsel %vm193, %v192, -inf
    %198 = vmax.xlane.f32.xlu0 %v197
    %v199 = vpop.xlane.xlu0 %198
    %v200 = vsub.f32 %v191, %v196
    %v201 = vsub.f32 %v192, %v199
    %v202 = vmul.f32 %v200, 1.442695
    %v203 = vpow.pop %v202
    %v204 = vmul.f32 %v201, 1.442695
    %v205 = vpow.pop %v204
    %v206 = vsel %vm193, %v203, 0.0
    %207 = vadd.xlane.f32.xlu0 %v206
    %v208 = vpop.xlane.xlu0 %207
    %v209 = vsel %vm193, %v205, 0.0
    %210 = vadd.xlane.f32.xlu0 %v209
    %v211 = vpop.xlane.xlu0 %210
    %v212 = vrcp.pop %v208
    %v213 = vrcp.pop %v211
    %v214 = vmul.f32 %v203, %v212
    %v215 = vmul.f32 %v205, %v213
    %v216 = vpack.c.bf16 %v215, %v214
    %217 = vrot.lane.b32.xlu0 %v164, 64
    %v218 = vpop.permute.xlu0 %217
    %v221 = vsel %vm193, %v216, 0
    %223 = vmatpush.bf16.msra.mxu0 0
    %224 = vmatpush.bf16.msra.mxu0 0
    %225 = vmatpush.bf16.msra.mxu0 0
    %226 = vmatpush.bf16.msra.mxu0 0
    %227 = vmatpush.bf16.msra.mxu0 0
    %228 = vmatpush.bf16.msra.mxu0 0
    %229 = vmatpush.bf16.msra.mxu0 0
    %230 = vmatpush.bf16.msra.mxu0 %v218
    %231 = vmatmul.bf16.gmra.mxu0 %v221
    %v232 = vpop.f32.mrf.mxu0
    %v233 = vadd.f32 0.0, %v232
    %v234 = vpop.f32.mrf.mxu0
    %v235 = vadd.f32 0.0, %v234
    %236 = vdwg.mxu0
    %v237 = vpack.c.bf16 %v235, %v233
    %v238 = vpack.c.bf16 %v160, %v160
    %239 = vrot.lane.b32.xlu0 %v164, 120
    %v240 = vpop.permute.xlu0 %239
    %241 = vrot.lane.b32.xlu0 %v164, 88
    %v242 = vpop.permute.xlu0 %241
    %v244 = vsel %vm168, %v240, 0
    %v247 = vsel %vm168, %v242, 0
    %249 = vmatpush.bf16.xpose.msra.mxu0 0
    %250 = vmatpush.bf16.xpose.msra.mxu0 0
    %251 = vmatpush.bf16.xpose.msra.mxu0 0
    %252 = vmatpush.bf16.xpose.msra.mxu0 0
    %253 = vmatpush.bf16.xpose.msra.mxu0 0
    %254 = vmatpush.bf16.xpose.msra.mxu0 0
    %255 = vmatpush.bf16.xpose.msra.mxu0 0
    %256 = vmatpush.bf16.xpose.msra.mxu0 %v247
    %257 = vmatmul.bf16.gmra.mxu0 %v244
    %v258 = vpop.f32.mrf.mxu0
    %v259 = vadd.f32 0.0, %v258
    %v260 = vpop.f32.mrf.mxu0
    %v261 = vadd.f32 0.0, %v260
    %262 = vdwg.mxu0
    %v263 = vmul.f32 %v259, 0.35355338
    %v264 = vmul.f32 %v261, 0.35355338
    %v265 = vadd.f32 %v263, %v66
    %v266 = vadd.f32 %v264, %v67
    %v267 = vsel %vm193, %v265, -inf
    %268 = vmax.xlane.f32.xlu0 %v267
    %v269 = vpop.xlane.xlu0 %268
    %v270 = vsel %vm193, %v266, -inf
    %271 = vmax.xlane.f32.xlu0 %v270
    %v272 = vpop.xlane.xlu0 %271
    %v273 = vsub.f32 %v265, %v269
    %v274 = vsub.f32 %v266, %v272
    %v275 = vmul.f32 %v273, 1.442695
    %v276 = vpow.pop %v275
    %v277 = vmul.f32 %v274, 1.442695
    %v278 = vpow.pop %v277
    %v279 = vsel %vm193, %v276, 0.0
    %280 = vadd.xlane.f32.xlu0 %v279
    %v281 = vpop.xlane.xlu0 %280
    %v282 = vsel %vm193, %v278, 0.0
    %283 = vadd.xlane.f32.xlu0 %v282
    %v284 = vpop.xlane.xlu0 %283
    %v285 = vrcp.pop %v281
    %v286 = vrcp.pop %v284
    %v287 = vmul.f32 %v276, %v285
    %v288 = vmul.f32 %v278, %v286
    %v289 = vpack.c.bf16 %v288, %v287
    %290 = vrot.lane.b32.xlu0 %v164, 56
    %v291 = vpop.permute.xlu0 %290
    %v294 = vsel %vm193, %v289, 0
    %296 = vmatpush.bf16.msra.mxu0 0
    %297 = vmatpush.bf16.msra.mxu0 0
    %298 = vmatpush.bf16.msra.mxu0 0
    %299 = vmatpush.bf16.msra.mxu0 0
    %300 = vmatpush.bf16.msra.mxu0 0
    %301 = vmatpush.bf16.msra.mxu0 0
    %302 = vmatpush.bf16.msra.mxu0 0
    %303 = vmatpush.bf16.msra.mxu0 %v291
    %304 = vmatmul.bf16.gmra.mxu0 %v294
    %v305 = vpop.f32.mrf.mxu0
    %v306 = vadd.f32 0.0, %v305
    %v307 = vpop.f32.mrf.mxu0
    %v308 = vadd.f32 0.0, %v307
    %309 = vdwg.mxu0
    %v310 = vpack.c.bf16 %v308, %v306
    %v311 = vpack.c.bf16 %v161, %v161
    %v313 = vsel %vm168, %v310, 0
    %vm315 = vcmask 1043456
    %v317 = vsel %vm315, %v311, 0
    %319 = vmatpush.bf16.msra.mxu0 0
    %320 = vmatpush.bf16.msra.mxu0 0
    %321 = vmatpush.bf16.msra.mxu0 0
    %322 = vmatpush.bf16.msra.mxu0 0
    %323 = vmatpush.bf16.msra.mxu0 0
    %324 = vmatpush.bf16.msra.mxu0 0
    %325 = vmatpush.bf16.msra.mxu0 0
    %326 = vmatpush.bf16.msra.mxu0 %v317
    %327 = vmatmul.bf16.gmra.mxu0 %v313
    %v328 = vpop.f32.mrf.mxu0
    %v329 = vadd.f32 0.0, %v328
    %v330 = vpop.f32.mrf.mxu0
    %v331 = vadd.f32 0.0, %v330
    %332 = vdwg.mxu0
    %v334 = vsel %vm168, %v237, 0
    %v337 = vsel %vm315, %v238, 0
    %339 = vmatpush.bf16.msra.mxu0 0
    %340 = vmatpush.bf16.msra.mxu0 0
    %341 = vmatpush.bf16.msra.mxu0 0
    %342 = vmatpush.bf16.msra.mxu0 0
    %343 = vmatpush.bf16.msra.mxu0 0
    %344 = vmatpush.bf16.msra.mxu0 0
    %345 = vmatpush.bf16.msra.mxu0 0
    %346 = vmatpush.bf16.msra.mxu0 %v337
    %347 = vmatmul.bf16.gmra.mxu0 %v334
    %v348 = vpop.f32.mrf.mxu0
    %v349 = vadd.f32 %v329, %v348
    %v350 = vpop.f32.mrf.mxu0
    %v351 = vadd.f32 %v331, %v350
    %352 = vdwg.mxu0
    %353 = vrot.lane.b32.xlu0 %v164, 112
    %v354 = vpop.permute.xlu0 %353
    %355 = vrot.lane.b32.xlu0 %v164, 80
    %v356 = vpop.permute.xlu0 %355
    %v358 = vsel %vm168, %v354, 0
    %v361 = vsel %vm168, %v356, 0
    %363 = vmatpush.bf16.xpose.msra.mxu0 0
    %364 = vmatpush.bf16.xpose.msra.mxu0 0
    %365 = vmatpush.bf16.xpose.msra.mxu0 0
    %366 = vmatpush.bf16.xpose.msra.mxu0 0
    %367 = vmatpush.bf16.xpose.msra.mxu0 0
    %368 = vmatpush.bf16.xpose.msra.mxu0 0
    %369 = vmatpush.bf16.xpose.msra.mxu0 0
    %370 = vmatpush.bf16.xpose.msra.mxu0 %v361
    %371 = vmatmul.bf16.gmra.mxu0 %v358
    %v372 = vpop.f32.mrf.mxu0
    %v373 = vadd.f32 0.0, %v372
    %v374 = vpop.f32.mrf.mxu0
    %v375 = vadd.f32 0.0, %v374
    %376 = vdwg.mxu0
    %v377 = vmul.f32 %v373, 0.35355338
    %v378 = vmul.f32 %v375, 0.35355338
    %v379 = vadd.f32 %v377, %v66
    %v380 = vadd.f32 %v378, %v67
    %v381 = vsel %vm193, %v379, -inf
    %382 = vmax.xlane.f32.xlu0 %v381
    %v383 = vpop.xlane.xlu0 %382
    %v384 = vsel %vm193, %v380, -inf
    %385 = vmax.xlane.f32.xlu0 %v384
    %v386 = vpop.xlane.xlu0 %385
    %v387 = vsub.f32 %v379, %v383
    %v388 = vsub.f32 %v380, %v386
    %v389 = vmul.f32 %v387, 1.442695
    %v390 = vpow.pop %v389
    %v391 = vmul.f32 %v388, 1.442695
    %v392 = vpow.pop %v391
    %v393 = vsel %vm193, %v390, 0.0
    %394 = vadd.xlane.f32.xlu0 %v393
    %v395 = vpop.xlane.xlu0 %394
    %v396 = vsel %vm193, %v392, 0.0
    %397 = vadd.xlane.f32.xlu0 %v396
    %v398 = vpop.xlane.xlu0 %397
    %v399 = vrcp.pop %v395
    %v400 = vrcp.pop %v398
    %v401 = vmul.f32 %v390, %v399
    %v402 = vmul.f32 %v392, %v400
    %v403 = vpack.c.bf16 %v402, %v401
    %404 = vrot.lane.b32.xlu0 %v164, 48
    %v405 = vpop.permute.xlu0 %404
    %v408 = vsel %vm193, %v403, 0
    %410 = vmatpush.bf16.msra.mxu0 0
    %411 = vmatpush.bf16.msra.mxu0 0
    %412 = vmatpush.bf16.msra.mxu0 0
    %413 = vmatpush.bf16.msra.mxu0 0
    %414 = vmatpush.bf16.msra.mxu0 0
    %415 = vmatpush.bf16.msra.mxu0 0
    %416 = vmatpush.bf16.msra.mxu0 0
    %417 = vmatpush.bf16.msra.mxu0 %v405
    %418 = vmatmul.bf16.gmra.mxu0 %v408
    %v419 = vpop.f32.mrf.mxu0
    %v420 = vadd.f32 0.0, %v419
    %v421 = vpop.f32.mrf.mxu0
    %v422 = vadd.f32 0.0, %v421
    %423 = vdwg.mxu0
    %v424 = vpack.c.bf16 %v422, %v420
    %v425 = vpack.c.bf16 %v162, %v162
    %v427 = vsel %vm168, %v424, 0
    %v430 = vsel %vm315, %v425, 0
    %432 = vmatpush.bf16.msra.mxu0 0
    %433 = vmatpush.bf16.msra.mxu0 0
    %434 = vmatpush.bf16.msra.mxu0 0
    %435 = vmatpush.bf16.msra.mxu0 0
    %436 = vmatpush.bf16.msra.mxu0 0
    %437 = vmatpush.bf16.msra.mxu0 0
    %438 = vmatpush.bf16.msra.mxu0 0
    %439 = vmatpush.bf16.msra.mxu0 %v430
    %440 = vmatmul.bf16.gmra.mxu0 %v427
    %v441 = vpop.f32.mrf.mxu0
    %v442 = vadd.f32 0.0, %v441
    %v443 = vpop.f32.mrf.mxu0
    %v444 = vadd.f32 0.0, %v443
    %445 = vdwg.mxu0
    %v446 = vadd.f32 %v349, %v442
    %v447 = vadd.f32 %v351, %v444
    %448 = vrot.lane.b32.xlu0 %v164, 104
    %v449 = vpop.permute.xlu0 %448
    %450 = vrot.lane.b32.xlu0 %v164, 72
    %v451 = vpop.permute.xlu0 %450
    %v453 = vsel %vm168, %v449, 0
    %v456 = vsel %vm168, %v451, 0
    %458 = vmatpush.bf16.xpose.msra.mxu0 0
    %459 = vmatpush.bf16.xpose.msra.mxu0 0
    %460 = vmatpush.bf16.xpose.msra.mxu0 0
    %461 = vmatpush.bf16.xpose.msra.mxu0 0
    %462 = vmatpush.bf16.xpose.msra.mxu0 0
    %463 = vmatpush.bf16.xpose.msra.mxu0 0
    %464 = vmatpush.bf16.xpose.msra.mxu0 0
    %465 = vmatpush.bf16.xpose.msra.mxu0 %v456
    %466 = vmatmul.bf16.gmra.mxu0 %v453
    %v467 = vpop.f32.mrf.mxu0
    %v468 = vadd.f32 0.0, %v467
    %v469 = vpop.f32.mrf.mxu0
    %v470 = vadd.f32 0.0, %v469
    %471 = vdwg.mxu0
    %v472 = vmul.f32 %v468, 0.35355338
    %v473 = vmul.f32 %v470, 0.35355338
    %v474 = vadd.f32 %v472, %v66
    %v475 = vadd.f32 %v473, %v67
    %v476 = vsel %vm193, %v474, -inf
    %477 = vmax.xlane.f32.xlu0 %v476
    %v478 = vpop.xlane.xlu0 %477
    %v479 = vsel %vm193, %v475, -inf
    %480 = vmax.xlane.f32.xlu0 %v479
    %v481 = vpop.xlane.xlu0 %480
    %v482 = vsub.f32 %v474, %v478
    %v483 = vsub.f32 %v475, %v481
    %v484 = vmul.f32 %v482, 1.442695
    %v485 = vpow.pop %v484
    %v486 = vmul.f32 %v483, 1.442695
    %v487 = vpow.pop %v486
    %v488 = vsel %vm193, %v485, 0.0
    %489 = vadd.xlane.f32.xlu0 %v488
    %v490 = vpop.xlane.xlu0 %489
    %v491 = vsel %vm193, %v487, 0.0
    %492 = vadd.xlane.f32.xlu0 %v491
    %v493 = vpop.xlane.xlu0 %492
    %v494 = vrcp.pop %v490
    %v495 = vrcp.pop %v493
    %v496 = vmul.f32 %v485, %v494
    %v497 = vmul.f32 %v487, %v495
    %v498 = vpack.c.bf16 %v497, %v496
    %499 = vrot.lane.b32.xlu0 %v164, 40
    %v500 = vpop.permute.xlu0 %499
    %v503 = vsel %vm193, %v498, 0
    %505 = vmatpush.bf16.msra.mxu0 0
    %506 = vmatpush.bf16.msra.mxu0 0
    %507 = vmatpush.bf16.msra.mxu0 0
    %508 = vmatpush.bf16.msra.mxu0 0
    %509 = vmatpush.bf16.msra.mxu0 0
    %510 = vmatpush.bf16.msra.mxu0 0
    %511 = vmatpush.bf16.msra.mxu0 0
    %512 = vmatpush.bf16.msra.mxu0 %v500
    %513 = vmatmul.bf16.gmra.mxu0 %v503
    %v514 = vpop.f32.mrf.mxu0
    %v515 = vadd.f32 0.0, %v514
    %v516 = vpop.f32.mrf.mxu0
    %v517 = vadd.f32 0.0, %v516
    %518 = vdwg.mxu0
    %v519 = vpack.c.bf16 %v517, %v515
    %v520 = vpack.c.bf16 %v163, %v163
    %v522 = vsel %vm168, %v519, 0
    %v525 = vsel %vm315, %v520, 0
    %527 = vmatpush.bf16.msra.mxu0 0
    %528 = vmatpush.bf16.msra.mxu0 0
    %529 = vmatpush.bf16.msra.mxu0 0
    %530 = vmatpush.bf16.msra.mxu0 0
    %531 = vmatpush.bf16.msra.mxu0 0
    %532 = vmatpush.bf16.msra.mxu0 0
    %533 = vmatpush.bf16.msra.mxu0 0
    %534 = vmatpush.bf16.msra.mxu0 %v525
    %535 = vmatmul.bf16.gmra.mxu0 %v522
    %v536 = vpop.f32.mrf.mxu0
    %v537 = vadd.f32 0.0, %v536
    %v538 = vpop.f32.mrf.mxu0
    %v539 = vadd.f32 0.0, %v538
    %540 = vdwg.mxu0
    %v541 = vadd.f32 %v446, %v537
    %v542 = vadd.f32 %v447, %v539
    %v543 = vadd.f32 %v64, %v541
    %v544 = vadd.f32 %v65, %v542
    %v545 = vld [vmem:[%s9] sm:$0x1]
    %v547 = vperm.slane %v545, 0
    %v549 = vadd.f32 %v543, %v547
    %v550 = vadd.f32 %v544, %v547
    %v551 = vld [vmem:[%s10] sm:$0x1]
    %v552 = vld [vmem:[%s11] sm:$0x1]
    %v553 = vsel %vm70, %v549, 0.0
    %554 = vadd.xlane.f32.xlu0 %v553
    %v555 = vpop.xlane.xlu0 %554
    %v556 = vsel %vm70, %v550, 0.0
    %557 = vadd.xlane.f32.xlu0 %v556
    %v558 = vpop.xlane.xlu0 %557
    %v559 = vmul.f32 %v555, %v83
    %v560 = vmul.f32 %v558, %v83
    %v561 = vsub.f32 %v549, %v559
    %v562 = vsub.f32 %v550, %v560
    %v563 = vmul.f32 %v561, %v561
    %v564 = vmul.f32 %v562, %v562
    %v565 = vsel %vm70, %v563, 0.0
    %566 = vadd.xlane.f32.xlu0 %v565
    %v567 = vpop.xlane.xlu0 %566
    %v568 = vsel %vm70, %v564, 0.0
    %569 = vadd.xlane.f32.xlu0 %v568
    %v570 = vpop.xlane.xlu0 %569
    %v571 = vmul.f32 %v567, %v83
    %v572 = vmul.f32 %v570, %v83
    %v573 = vadd.f32 %v571, 1e-05
    %v574 = vadd.f32 %v572, 1e-05
    %v575 = vrsqrt.pop %v573
    %v576 = vmul.f32 %v575, %v573
    %v577 = vmul.f32 %v576, %v575
    %v578 = vmul.f32 0.5, %v577
    %v579 = vsub.f32 1.5, %v578
    %v580 = vmul.f32 %v575, %v579
    %vm581 = vweird.f32 %v573
    %vm582 = vweird.f32 %v575
    %vm583 = vmor %vm581, %vm582
    %v584 = vsel %vm583, %v575, %v580
    %v585 = vrsqrt.pop %v574
    %v586 = vmul.f32 %v585, %v574
    %v587 = vmul.f32 %v586, %v585
    %v588 = vmul.f32 0.5, %v587
    %v589 = vsub.f32 1.5, %v588
    %v590 = vmul.f32 %v585, %v589
    %vm591 = vweird.f32 %v574
    %vm592 = vweird.f32 %v585
    %vm593 = vmor %vm591, %vm592
    %v594 = vsel %vm593, %v585, %v590
    %v595 = vmul.f32 %v561, %v584
    %v596 = vmul.f32 %v562, %v594
    %v598 = vperm.slane %v551, 0
    %v600 = vmul.f32 %v595, %v598
    %v601 = vmul.f32 %v596, %v598
    %v603 = vperm.slane %v552, 0
    %v605 = vadd.f32 %v600, %v603
    %v606 = vadd.f32 %v601, %v603
    %v607 = vld [vmem:[%s12] sm:$0xff]
    %v608 = vld [vmem:[%s12 + $0x8] sm:$0xff]
    %v609 = vld [vmem:[%s12 + $0x10] sm:$0xff]
    %v610 = vld [vmem:[%s12 + $0x18] sm:$0xff]
    %v611 = vpack.c.bf16 %v606, %v605
    %v612 = vpack.c.bf16 %v608, %v607
    %v613 = vpack.c.bf16 %v610, %v609
    %v614 = vld [vmem:[%s13] sm:$0x1]
    %v616 = vperm.slane %v614, 0
    %v619 = vsel %vm70, %v611, 0
    %621 = vmatpush.bf16.msra.mxu0 0
    %622 = vmatpush.bf16.msra.mxu0 0
    %623 = vmatpush.bf16.msra.mxu0 0
    %624 = vmatpush.bf16.msra.mxu0 0
    %625 = vmatpush.bf16.msra.mxu0 0
    %626 = vmatpush.bf16.msra.mxu0 0
    %627 = vmatpush.bf16.msra.mxu0 %v613
    %628 = vmatpush.bf16.msra.mxu0 %v612
    %629 = vmatmul.bf16.gmra.mxu0 %v619
    %v630 = vpop.f32.mrf.mxu0
    %v631 = vadd.f32 %v616, %v630
    %v632 = vpop.f32.mrf.mxu0
    %v633 = vadd.f32 %v616, %v632
    %634 = vdwg.mxu0
    %v635 = vmul.f32 %v631, 0.5
    %v636 = vmul.f32 %v633, 0.5
    %v637 = vmul.f32 %v631, 0.044715
    %v638 = vmul.f32 %v633, 0.044715
    %v639 = vmul.f32 %v637, %v631
    %v640 = vmul.f32 %v638, %v633
    %v641 = vmul.f32 %v639, %v631
    %v642 = vmul.f32 %v640, %v633
    %v643 = vadd.f32 %v631, %v641
    %v644 = vadd.f32 %v633, %v642
    %v645 = vmul.f32 %v643, 0.7978846
    %v646 = vmul.f32 %v644, 0.7978846
    %v647 = vtanh.pop %v645
    %v648 = vtanh.pop %v646
    %v649 = vadd.f32 %v647, 1.0
    %v650 = vadd.f32 %v648, 1.0
    %v651 = vmul.f32 %v635, %v649
    %v652 = vmul.f32 %v636, %v650
    %v653 = vld [vmem:[%s14] sm:$0xff]
    %v654 = vld [vmem:[%s14 + $0x8] sm:$0xff]
    %v655 = vld [vmem:[%s14 + $0x10] sm:$0xff]
    %v656 = vld [vmem:[%s14 + $0x18] sm:$0xff]
    %v657 = vld [vmem:[%s14 + $0x20] sm:$0xff]
    %v658 = vld [vmem:[%s14 + $0x28] sm:$0xff]
    %v659 = vld [vmem:[%s14 + $0x30] sm:$0xff]
    %v660 = vld [vmem:[%s14 + $0x38] sm:$0xff]
    %v661 = vld [vmem:[%s14 + $0x40] sm:$0xff]
    %v662 = vld [vmem:[%s14 + $0x48] sm:$0xff]
    %v663 = vld [vmem:[%s14 + $0x50] sm:$0xff]
    %v664 = vld [vmem:[%s14 + $0x58] sm:$0xff]
    %v665 = vld [vmem:[%s14 + $0x60] sm:$0xff]
    %v666 = vld [vmem:[%s14 + $0x68] sm:$0xff]
    %v667 = vld [vmem:[%s14 + $0x70] sm:$0xff]
    %v668 = vld [vmem:[%s14 + $0x78] sm:$0xff]
    %v669 = vpack.c.bf16 %v652, %v651
    %v670 = vpack.c.bf16 %v654, %v653
    %v671 = vpack.c.bf16 %v656, %v655
    %v672 = vpack.c.bf16 %v658, %v657
    %v673 = vpack.c.bf16 %v660, %v659
    %v674 = vpack.c.bf16 %v662, %v661
    %v675 = vpack.c.bf16 %v664, %v663
    %v676 = vpack.c.bf16 %v666, %v665
    %v677 = vpack.c.bf16 %v668, %v667
    %678 = vmatpush.bf16.msra.mxu0 %v677
    %679 = vmatpush.bf16.msra.mxu0 %v676
    %680 = vmatpush.bf16.msra.mxu0 %v675
    %681 = vmatpush.bf16.msra.mxu0 %v674
    %682 = vmatpush.bf16.msra.mxu0 %v673
    %683 = vmatpush.bf16.msra.mxu0 %v672
    %684 = vmatpush.bf16.msra.mxu0 %v671
    %685 = vmatpush.bf16.msra.mxu0 %v670
    %686 = vmatmul.bf16.gmra.mxu0 %v669
    %v687 = vpop.f32.mrf.mxu0
    %v688 = vadd.f32 0.0, %v687
    %v689 = vpop.f32.mrf.mxu0
    %v690 = vadd.f32 0.0, %v689
    %691 = vdwg.mxu0
    %v692 = vadd.f32 %v549, %v688
    %v693 = vadd.f32 %v550, %v690
    %v694 = vld [vmem:[%s15] sm:$0x1]
    %v696 = vperm.slane %v694, 0
    %v698 = vadd.f32 %v692, %v696
    %v699 = vadd.f32 %v693, %v696
    %s700 = scalar_lea.vmem %s4, 1
    %v701 = vld [vmem:[%s700] sm:$0x1]
    %s702 = scalar_lea.vmem %s5, 1
    %v703 = vld [vmem:[%s702] sm:$0x1]
    %v704 = vsel %vm70, %v698, 0.0
    %705 = vadd.xlane.f32.xlu0 %v704
    %v706 = vpop.xlane.xlu0 %705
    %v707 = vsel %vm70, %v699, 0.0
    %708 = vadd.xlane.f32.xlu0 %v707
    %v709 = vpop.xlane.xlu0 %708
    %v710 = vmul.f32 %v706, %v83
    %v711 = vmul.f32 %v709, %v83
    %v712 = vsub.f32 %v698, %v710
    %v713 = vsub.f32 %v699, %v711
    %v714 = vmul.f32 %v712, %v712
    %v715 = vmul.f32 %v713, %v713
    %v716 = vsel %vm70, %v714, 0.0
    %717 = vadd.xlane.f32.xlu0 %v716
    %v718 = vpop.xlane.xlu0 %717
    %v719 = vsel %vm70, %v715, 0.0
    %720 = vadd.xlane.f32.xlu0 %v719
    %v721 = vpop.xlane.xlu0 %720
    %v722 = vmul.f32 %v718, %v83
    %v723 = vmul.f32 %v721, %v83
    %v724 = vadd.f32 %v722, 1e-05
    %v725 = vadd.f32 %v723, 1e-05
    %v726 = vrsqrt.pop %v724
    %v727 = vmul.f32 %v726, %v724
    %v728 = vmul.f32 %v727, %v726
    %v729 = vmul.f32 0.5, %v728
    %v730 = vsub.f32 1.5, %v729
    %v731 = vmul.f32 %v726, %v730
    %vm732 = vweird.f32 %v724
    %vm733 = vweird.f32 %v726
    %vm734 = vmor %vm732, %vm733
    %v735 = vsel %vm734, %v726, %v731
    %v736 = vrsqrt.pop %v725
    %v737 = vmul.f32 %v736, %v725
    %v738 = vmul.f32 %v737, %v736
    %v739 = vmul.f32 0.5, %v738
    %v740 = vsub.f32 1.5, %v739
    %v741 = vmul.f32 %v736, %v740
    %vm742 = vweird.f32 %v725
    %vm743 = vweird.f32 %v736
    %vm744 = vmor %vm742, %vm743
    %v745 = vsel %vm744, %v736, %v741
    %v746 = vmul.f32 %v712, %v735
    %v747 = vmul.f32 %v713, %v745
    %v749 = vperm.slane %v701, 0
    %v751 = vmul.f32 %v746, %v749
    %v752 = vmul.f32 %v747, %v749
    %v754 = vperm.slane %v703, 0
    %v756 = vadd.f32 %v751, %v754
    %v757 = vadd.f32 %v752, %v754
    %s758 = scalar_lea.vmem %s6, 32
    %v759 = vld [vmem:[%s758] sm:$0xff]
    %v760 = vld [vmem:[%s758 + $0x8] sm:$0xff]
    %v761 = vld [vmem:[%s758 + $0x10] sm:$0xff]
    %v762 = vld [vmem:[%s758 + $0x18] sm:$0xff]
    %v763 = vpack.c.bf16 %v757, %v756
    %v764 = vpack.c.bf16 %v760, %v759
    %v765 = vpack.c.bf16 %v762, %v761
    %s766 = scalar_lea.vmem %s7, 1
    %v767 = vld [vmem:[%s766] sm:$0x1]
    %v769 = vperm.slane %v767, 0
    %v772 = vsel %vm70, %v763, 0
    %774 = vmatpush.bf16.msra.mxu0 0
    %775 = vmatpush.bf16.msra.mxu0 0
    %776 = vmatpush.bf16.msra.mxu0 0
    %777 = vmatpush.bf16.msra.mxu0 0
    %778 = vmatpush.bf16.msra.mxu0 0
    %779 = vmatpush.bf16.msra.mxu0 0
    %780 = vmatpush.bf16.msra.mxu0 %v765
    %781 = vmatpush.bf16.msra.mxu0 %v764
    %782 = vmatmul.bf16.gmra.mxu0 %v772
    %v783 = vpop.f32.mrf.mxu0
    %v784 = vadd.f32 %v769, %v783
    %v785 = vpop.f32.mrf.mxu0
    %v786 = vadd.f32 %v769, %v785
    %787 = vdwg.mxu0
    %s788 = scalar_lea.vmem %s8, 32
    %v789 = vld [vmem:[%s788] sm:$0xff]
    %v790 = vld [vmem:[%s788 + $0x8] sm:$0xff]
    %v791 = vld [vmem:[%s788 + $0x10] sm:$0xff]
    %v792 = vld [vmem:[%s788 + $0x18] sm:$0xff]
    %v793 = vpack.c.bf16 %v786, %v784
    %795 = vrot.lane.b32.xlu0 %v793, 96
    %v796 = vpop.permute.xlu0 %795
    %v798 = vsel %vm168, %v793, 0
    %v801 = vsel %vm168, %v796, 0
    %803 = vmatpush.bf16.xpose.msra.mxu0 0
    %804 = vmatpush.bf16.xpose.msra.mxu0 0
    %805 = vmatpush.bf16.xpose.msra.mxu0 0
    %806 = vmatpush.bf16.xpose.msra.mxu0 0
    %807 = vmatpush.bf16.xpose.msra.mxu0 0
    %808 = vmatpush.bf16.xpose.msra.mxu0 0
    %809 = vmatpush.bf16.xpose.msra.mxu0 0
    %810 = vmatpush.bf16.xpose.msra.mxu0 %v801
    %811 = vmatmul.bf16.gmra.mxu0 %v798
    %v812 = vpop.f32.mrf.mxu0
    %v813 = vadd.f32 0.0, %v812
    %v814 = vpop.f32.mrf.mxu0
    %v815 = vadd.f32 0.0, %v814
    %816 = vdwg.mxu0
    %v817 = vmul.f32 %v813, 0.35355338
    %v818 = vmul.f32 %v815, 0.35355338
    %v819 = vadd.f32 %v817, %v66
    %v820 = vadd.f32 %v818, %v67
    %v821 = vsel %vm193, %v819, -inf
    %822 = vmax.xlane.f32.xlu0 %v821
    %v823 = vpop.xlane.xlu0 %822
    %v824 = vsel %vm193, %v820, -inf
    %825 = vmax.xlane.f32.xlu0 %v824
    %v826 = vpop.xlane.xlu0 %825
    %v827 = vsub.f32 %v819, %v823
    %v828 = vsub.f32 %v820, %v826
    %v829 = vmul.f32 %v827, 1.442695
    %v830 = vpow.pop %v829
    %v831 = vmul.f32 %v828, 1.442695
    %v832 = vpow.pop %v831
    %v833 = vsel %vm193, %v830, 0.0
    %834 = vadd.xlane.f32.xlu0 %v833
    %v835 = vpop.xlane.xlu0 %834
    %v836 = vsel %vm193, %v832, 0.0
    %837 = vadd.xlane.f32.xlu0 %v836
    %v838 = vpop.xlane.xlu0 %837
    %v839 = vrcp.pop %v835
    %v840 = vrcp.pop %v838
    %v841 = vmul.f32 %v830, %v839
    %v842 = vmul.f32 %v832, %v840
    %v843 = vpack.c.bf16 %v842, %v841
    %844 = vrot.lane.b32.xlu0 %v793, 64
    %v845 = vpop.permute.xlu0 %844
    %v848 = vsel %vm193, %v843, 0
    %850 = vmatpush.bf16.msra.mxu0 0
    %851 = vmatpush.bf16.msra.mxu0 0
    %852 = vmatpush.bf16.msra.mxu0 0
    %853 = vmatpush.bf16.msra.mxu0 0
    %854 = vmatpush.bf16.msra.mxu0 0
    %855 = vmatpush.bf16.msra.mxu0 0
    %856 = vmatpush.bf16.msra.mxu0 0
    %857 = vmatpush.bf16.msra.mxu0 %v845
    %858 = vmatmul.bf16.gmra.mxu0 %v848
    %v859 = vpop.f32.mrf.mxu0
    %v860 = vadd.f32 0.0, %v859
    %v861 = vpop.f32.mrf.mxu0
    %v862 = vadd.f32 0.0, %v861
    %863 = vdwg.mxu0
    %v864 = vpack.c.bf16 %v862, %v860
    %v865 = vpack.c.bf16 %v789, %v789
    %866 = vrot.lane.b32.xlu0 %v793, 120
    %v867 = vpop.permute.xlu0 %866
    %868 = vrot.lane.b32.xlu0 %v793, 88
    %v869 = vpop.permute.xlu0 %868
    %v871 = vsel %vm168, %v867, 0
    %v874 = vsel %vm168, %v869, 0
    %876 = vmatpush.bf16.xpose.msra.mxu0 0
    %877 = vmatpush.bf16.xpose.msra.mxu0 0
    %878 = vmatpush.bf16.xpose.msra.mxu0 0
    %879 = vmatpush.bf16.xpose.msra.mxu0 0
    %880 = vmatpush.bf16.xpose.msra.mxu0 0
    %881 = vmatpush.bf16.xpose.msra.mxu0 0
    %882 = vmatpush.bf16.xpose.msra.mxu0 0
    %883 = vmatpush.bf16.xpose.msra.mxu0 %v874
    %884 = vmatmul.bf16.gmra.mxu0 %v871
    %v885 = vpop.f32.mrf.mxu0
    %v886 = vadd.f32 0.0, %v885
    %v887 = vpop.f32.mrf.mxu0
    %v888 = vadd.f32 0.0, %v887
    %889 = vdwg.mxu0
    %v890 = vmul.f32 %v886, 0.35355338
    %v891 = vmul.f32 %v888, 0.35355338
    %v892 = vadd.f32 %v890, %v66
    %v893 = vadd.f32 %v891, %v67
    %v894 = vsel %vm193, %v892, -inf
    %895 = vmax.xlane.f32.xlu0 %v894
    %v896 = vpop.xlane.xlu0 %895
    %v897 = vsel %vm193, %v893, -inf
    %898 = vmax.xlane.f32.xlu0 %v897
    %v899 = vpop.xlane.xlu0 %898
    %v900 = vsub.f32 %v892, %v896
    %v901 = vsub.f32 %v893, %v899
    %v902 = vmul.f32 %v900, 1.442695
    %v903 = vpow.pop %v902
    %v904 = vmul.f32 %v901, 1.442695
    %v905 = vpow.pop %v904
    %v906 = vsel %vm193, %v903, 0.0
    %907 = vadd.xlane.f32.xlu0 %v906
    %v908 = vpop.xlane.xlu0 %907
    %v909 = vsel %vm193, %v905, 0.0
    %910 = vadd.xlane.f32.xlu0 %v909
    %v911 = vpop.xlane.xlu0 %910
    %v912 = vrcp.pop %v908
    %v913 = vrcp.pop %v911
    %v914 = vmul.f32 %v903, %v912
    %v915 = vmul.f32 %v905, %v913
    %v916 = vpack.c.bf16 %v915, %v914
    %917 = vrot.lane.b32.xlu0 %v793, 56
    %v918 = vpop.permute.xlu0 %917
    %v921 = vsel %vm193, %v916, 0
    %923 = vmatpush.bf16.msra.mxu0 0
    %924 = vmatpush.bf16.msra.mxu0 0
    %925 = vmatpush.bf16.msra.mxu0 0
    %926 = vmatpush.bf16.msra.mxu0 0
    %927 = vmatpush.bf16.msra.mxu0 0
    %928 = vmatpush.bf16.msra.mxu0 0
    %929 = vmatpush.bf16.msra.mxu0 0
    %930 = vmatpush.bf16.msra.mxu0 %v918
    %931 = vmatmul.bf16.gmra.mxu0 %v921
    %v932 = vpop.f32.mrf.mxu0
    %v933 = vadd.f32 0.0, %v932
    %v934 = vpop.f32.mrf.mxu0
    %v935 = vadd.f32 0.0, %v934
    %936 = vdwg.mxu0
    %v937 = vpack.c.bf16 %v935, %v933
    %v938 = vpack.c.bf16 %v790, %v790
    %v940 = vsel %vm168, %v937, 0
    %v943 = vsel %vm315, %v938, 0
    %945 = vmatpush.bf16.msra.mxu0 0
    %946 = vmatpush.bf16.msra.mxu0 0
    %947 = vmatpush.bf16.msra.mxu0 0
    %948 = vmatpush.bf16.msra.mxu0 0
    %949 = vmatpush.bf16.msra.mxu0 0
    %950 = vmatpush.bf16.msra.mxu0 0
    %951 = vmatpush.bf16.msra.mxu0 0
    %952 = vmatpush.bf16.msra.mxu0 %v943
    %953 = vmatmul.bf16.gmra.mxu0 %v940
    %v954 = vpop.f32.mrf.mxu0
    %v955 = vadd.f32 0.0, %v954
    %v956 = vpop.f32.mrf.mxu0
    %v957 = vadd.f32 0.0, %v956
    %958 = vdwg.mxu0
    %v960 = vsel %vm168, %v864, 0
    %v963 = vsel %vm315, %v865, 0
    %965 = vmatpush.bf16.msra.mxu0 0
    %966 = vmatpush.bf16.msra.mxu0 0
    %967 = vmatpush.bf16.msra.mxu0 0
    %968 = vmatpush.bf16.msra.mxu0 0
    %969 = vmatpush.bf16.msra.mxu0 0
    %970 = vmatpush.bf16.msra.mxu0 0
    %971 = vmatpush.bf16.msra.mxu0 0
    %972 = vmatpush.bf16.msra.mxu0 %v963
    %973 = vmatmul.bf16.gmra.mxu0 %v960
    %v974 = vpop.f32.mrf.mxu0
    %v975 = vadd.f32 %v955, %v974
    %v976 = vpop.f32.mrf.mxu0
    %v977 = vadd.f32 %v957, %v976
    %978 = vdwg.mxu0
    %979 = vrot.lane.b32.xlu0 %v793, 112
    %v980 = vpop.permute.xlu0 %979
    %981 = vrot.lane.b32.xlu0 %v793, 80
    %v982 = vpop.permute.xlu0 %981
    %v984 = vsel %vm168, %v980, 0
    %v987 = vsel %vm168, %v982, 0
    %989 = vmatpush.bf16.xpose.msra.mxu0 0
    %990 = vmatpush.bf16.xpose.msra.mxu0 0
    %991 = vmatpush.bf16.xpose.msra.mxu0 0
    %992 = vmatpush.bf16.xpose.msra.mxu0 0
    %993 = vmatpush.bf16.xpose.msra.mxu0 0
    %994 = vmatpush.bf16.xpose.msra.mxu0 0
    %995 = vmatpush.bf16.xpose.msra.mxu0 0
    %996 = vmatpush.bf16.xpose.msra.mxu0 %v987
    %997 = vmatmul.bf16.gmra.mxu0 %v984
    %v998 = vpop.f32.mrf.mxu0
    %v999 = vadd.f32 0.0, %v998
    %v1000 = vpop.f32.mrf.mxu0
    %v1001 = vadd.f32 0.0, %v1000
    %1002 = vdwg.mxu0
    %v1003 = vmul.f32 %v999, 0.35355338
    %v1004 = vmul.f32 %v1001, 0.35355338
    %v1005 = vadd.f32 %v1003, %v66
    %v1006 = vadd.f32 %v1004, %v67
    %v1007 = vsel %vm193, %v1005, -inf
    %1008 = vmax.xlane.f32.xlu0 %v1007
    %v1009 = vpop.xlane.xlu0 %1008
    %v1010 = vsel %vm193, %v1006, -inf
    %1011 = vmax.xlane.f32.xlu0 %v1010
    %v1012 = vpop.xlane.xlu0 %1011
    %v1013 = vsub.f32 %v1005, %v1009
    %v1014 = vsub.f32 %v1006, %v1012
    %v1015 = vmul.f32 %v1013, 1.442695
    %v1016 = vpow.pop %v1015
    %v1017 = vmul.f32 %v1014, 1.442695
    %v1018 = vpow.pop %v1017
    %v1019 = vsel %vm193, %v1016, 0.0
    %1020 = vadd.xlane.f32.xlu0 %v1019
    %v1021 = vpop.xlane.xlu0 %1020
    %v1022 = vsel %vm193, %v1018, 0.0
    %1023 = vadd.xlane.f32.xlu0 %v1022
    %v1024 = vpop.xlane.xlu0 %1023
    %v1025 = vrcp.pop %v1021
    %v1026 = vrcp.pop %v1024
    %v1027 = vmul.f32 %v1016, %v1025
    %v1028 = vmul.f32 %v1018, %v1026
    %v1029 = vpack.c.bf16 %v1028, %v1027
    %1030 = vrot.lane.b32.xlu0 %v793, 48
    %v1031 = vpop.permute.xlu0 %1030
    %v1034 = vsel %vm193, %v1029, 0
    %1036 = vmatpush.bf16.msra.mxu0 0
    %1037 = vmatpush.bf16.msra.mxu0 0
    %1038 = vmatpush.bf16.msra.mxu0 0
    %1039 = vmatpush.bf16.msra.mxu0 0
    %1040 = vmatpush.bf16.msra.mxu0 0
    %1041 = vmatpush.bf16.msra.mxu0 0
    %1042 = vmatpush.bf16.msra.mxu0 0
    %1043 = vmatpush.bf16.msra.mxu0 %v1031
    %1044 = vmatmul.bf16.gmra.mxu0 %v1034
    %v1045 = vpop.f32.mrf.mxu0
    %v1046 = vadd.f32 0.0, %v1045
    %v1047 = vpop.f32.mrf.mxu0
    %v1048 = vadd.f32 0.0, %v1047
    %1049 = vdwg.mxu0
    %v1050 = vpack.c.bf16 %v1048, %v1046
    %v1051 = vpack.c.bf16 %v791, %v791
    %v1053 = vsel %vm168, %v1050, 0
    %v1056 = vsel %vm315, %v1051, 0
    %1058 = vmatpush.bf16.msra.mxu0 0
    %1059 = vmatpush.bf16.msra.mxu0 0
    %1060 = vmatpush.bf16.msra.mxu0 0
    %1061 = vmatpush.bf16.msra.mxu0 0
    %1062 = vmatpush.bf16.msra.mxu0 0
    %1063 = vmatpush.bf16.msra.mxu0 0
    %1064 = vmatpush.bf16.msra.mxu0 0
    %1065 = vmatpush.bf16.msra.mxu0 %v1056
    %1066 = vmatmul.bf16.gmra.mxu0 %v1053
    %v1067 = vpop.f32.mrf.mxu0
    %v1068 = vadd.f32 0.0, %v1067
    %v1069 = vpop.f32.mrf.mxu0
    %v1070 = vadd.f32 0.0, %v1069
    %1071 = vdwg.mxu0
    %v1072 = vadd.f32 %v975, %v1068
    %v1073 = vadd.f32 %v977, %v1070
    %1074 = vrot.lane.b32.xlu0 %v793, 104
    %v1075 = vpop.permute.xlu0 %1074
    %1076 = vrot.lane.b32.xlu0 %v793, 72
    %v1077 = vpop.permute.xlu0 %1076
    %v1079 = vsel %vm168, %v1075, 0
    %v1082 = vsel %vm168, %v1077, 0
    %1084 = vmatpush.bf16.xpose.msra.mxu0 0
    %1085 = vmatpush.bf16.xpose.msra.mxu0 0
    %1086 = vmatpush.bf16.xpose.msra.mxu0 0
    %1087 = vmatpush.bf16.xpose.msra.mxu0 0
    %1088 = vmatpush.bf16.xpose.msra.mxu0 0
    %1089 = vmatpush.bf16.xpose.msra.mxu0 0
    %1090 = vmatpush.bf16.xpose.msra.mxu0 0
    %1091 = vmatpush.bf16.xpose.msra.mxu0 %v1082
    %1092 = vmatmul.bf16.gmra.mxu0 %v1079
    %v1093 = vpop.f32.mrf.mxu0
    %v1094 = vadd.f32 0.0, %v1093
    %v1095 = vpop.f32.mrf.mxu0
    %v1096 = vadd.f32 0.0, %v1095
    %1097 = vdwg.mxu0
    %v1098 = vmul.f32 %v1094, 0.35355338
    %v1099 = vmul.f32 %v1096, 0.35355338
    %v1100 = vadd.f32 %v1098, %v66
    %v1101 = vadd.f32 %v1099, %v67
    %v1102 = vsel %vm193, %v1100, -inf
    %1103 = vmax.xlane.f32.xlu0 %v1102
    %v1104 = vpop.xlane.xlu0 %1103
    %v1105 = vsel %vm193, %v1101, -inf
    %1106 = vmax.xlane.f32.xlu0 %v1105
    %v1107 = vpop.xlane.xlu0 %1106
    %v1108 = vsub.f32 %v1100, %v1104
    %v1109 = vsub.f32 %v1101, %v1107
    %v1110 = vmul.f32 %v1108, 1.442695
    %v1111 = vpow.pop %v1110
    %v1112 = vmul.f32 %v1109, 1.442695
    %v1113 = vpow.pop %v1112
    %v1114 = vsel %vm193, %v1111, 0.0
    %1115 = vadd.xlane.f32.xlu0 %v1114
    %v1116 = vpop.xlane.xlu0 %1115
    %v1117 = vsel %vm193, %v1113, 0.0
    %1118 = vadd.xlane.f32.xlu0 %v1117
    %v1119 = vpop.xlane.xlu0 %1118
    %v1120 = vrcp.pop %v1116
    %v1121 = vrcp.pop %v1119
    %v1122 = vmul.f32 %v1111, %v1120
    %v1123 = vmul.f32 %v1113, %v1121
    %v1124 = vpack.c.bf16 %v1123, %v1122
    %1125 = vrot.lane.b32.xlu0 %v793, 40
    %v1126 = vpop.permute.xlu0 %1125
    %v1129 = vsel %vm193, %v1124, 0
    %1131 = vmatpush.bf16.msra.mxu0 0
    %1132 = vmatpush.bf16.msra.mxu0 0
    %1133 = vmatpush.bf16.msra.mxu0 0
    %1134 = vmatpush.bf16.msra.mxu0 0
    %1135 = vmatpush.bf16.msra.mxu0 0
    %1136 = vmatpush.bf16.msra.mxu0 0
    %1137 = vmatpush.bf16.msra.mxu0 0
    %1138 = vmatpush.bf16.msra.mxu0 %v1126
    %1139 = vmatmul.bf16.gmra.mxu0 %v1129
    %v1140 = vpop.f32.mrf.mxu0
    %v1141 = vadd.f32 0.0, %v1140
    %v1142 = vpop.f32.mrf.mxu0
    %v1143 = vadd.f32 0.0, %v1142
    %1144 = vdwg.mxu0
    %v1145 = vpack.c.bf16 %v1143, %v1141
    %v1146 = vpack.c.bf16 %v792, %v792
    %v1148 = vsel %vm168, %v1145, 0
    %v1151 = vsel %vm315, %v1146, 0
    %1153 = vmatpush.bf16.msra.mxu0 0
    %1154 = vmatpush.bf16.msra.mxu0 0
    %1155 = vmatpush.bf16.msra.mxu0 0
    %1156 = vmatpush.bf16.msra.mxu0 0
    %1157 = vmatpush.bf16.msra.mxu0 0
    %1158 = vmatpush.bf16.msra.mxu0 0
    %1159 = vmatpush.bf16.msra.mxu0 0
    %1160 = vmatpush.bf16.msra.mxu0 %v1151
    %1161 = vmatmul.bf16.gmra.mxu0 %v1148
    %v1162 = vpop.f32.mrf.mxu0
    %v1163 = vadd.f32 0.0, %v1162
    %v1164 = vpop.f32.mrf.mxu0
    %v1165 = vadd.f32 0.0, %v1164
    %1166 = vdwg.mxu0
    %v1167 = vadd.f32 %v1072, %v1163
    %v1168 = vadd.f32 %v1073, %v1165
    %v1169 = vadd.f32 %v698, %v1167
    %v1170 = vadd.f32 %v699, %v1168
    %s1171 = scalar_lea.vmem %s9, 1
    %v1172 = vld [vmem:[%s1171] sm:$0x1]
    %v1174 = vperm.slane %v1172, 0
    %v1176 = vadd.f32 %v1169, %v1174
    %v1177 = vadd.f32 %v1170, %v1174
    %s1178 = scalar_lea.vmem %s10, 1
    %v1179 = vld [vmem:[%s1178] sm:$0x1]
    %s1180 = scalar_lea.vmem %s11, 1
    %v1181 = vld [vmem:[%s1180] sm:$0x1]
    %v1182 = vsel %vm70, %v1176, 0.0
    %1183 = vadd.xlane.f32.xlu0 %v1182
    %v1184 = vpop.xlane.xlu0 %1183
    %v1185 = vsel %vm70, %v1177, 0.0
    %1186 = vadd.xlane.f32.xlu0 %v1185
    %v1187 = vpop.xlane.xlu0 %1186
    %v1188 = vmul.f32 %v1184, %v83
    %v1189 = vmul.f32 %v1187, %v83
    %v1190 = vsub.f32 %v1176, %v1188
    %v1191 = vsub.f32 %v1177, %v1189
    %v1192 = vmul.f32 %v1190, %v1190
    %v1193 = vmul.f32 %v1191, %v1191
    %v1194 = vsel %vm70, %v1192, 0.0
    %1195 = vadd.xlane.f32.xlu0 %v1194
    %v1196 = vpop.xlane.xlu0 %1195
    %v1197 = vsel %vm70, %v1193, 0.0
    %1198 = vadd.xlane.f32.xlu0 %v1197
    %v1199 = vpop.xlane.xlu0 %1198
    %v1200 = vmul.f32 %v1196, %v83
    %v1201 = vmul.f32 %v1199, %v83
    %v1202 = vadd.f32 %v1200, 1e-05
    %v1203 = vadd.f32 %v1201, 1e-05
    %v1204 = vrsqrt.pop %v1202
    %v1205 = vmul.f32 %v1204, %v1202
    %v1206 = vmul.f32 %v1205, %v1204
    %v1207 = vmul.f32 0.5, %v1206
    %v1208 = vsub.f32 1.5, %v1207
    %v1209 = vmul.f32 %v1204, %v1208
    %vm1210 = vweird.f32 %v1202
    %vm1211 = vweird.f32 %v1204
    %vm1212 = vmor %vm1210, %vm1211
    %v1213 = vsel %vm1212, %v1204, %v1209
    %v1214 = vrsqrt.pop %v1203
    %v1215 = vmul.f32 %v1214, %v1203
    %v1216 = vmul.f32 %v1215, %v1214
    %v1217 = vmul.f32 0.5, %v1216
    %v1218 = vsub.f32 1.5, %v1217
    %v1219 = vmul.f32 %v1214, %v1218
    %vm1220 = vweird.f32 %v1203
    %vm1221 = vweird.f32 %v1214
    %vm1222 = vmor %vm1220, %vm1221
    %v1223 = vsel %vm1222, %v1214, %v1219
    %v1224 = vmul.f32 %v1190, %v1213
    %v1225 = vmul.f32 %v1191, %v1223
    %v1227 = vperm.slane %v1179, 0
    %v1229 = vmul.f32 %v1224, %v1227
    %v1230 = vmul.f32 %v1225, %v1227
    %v1232 = vperm.slane %v1181, 0
    %v1234 = vadd.f32 %v1229, %v1232
    %v1235 = vadd.f32 %v1230, %v1232
    %s1236 = scalar_lea.vmem %s12, 32
    %v1237 = vld [vmem:[%s1236] sm:$0xff]
    %v1238 = vld [vmem:[%s1236 + $0x8] sm:$0xff]
    %v1239 = vld [vmem:[%s1236 + $0x10] sm:$0xff]
    %v1240 = vld [vmem:[%s1236 + $0x18] sm:$0xff]
    %v1241 = vpack.c.bf16 %v1235, %v1234
    %v1242 = vpack.c.bf16 %v1238, %v1237
    %v1243 = vpack.c.bf16 %v1240, %v1239
    %s1244 = scalar_lea.vmem %s13, 1
    %v1245 = vld [vmem:[%s1244] sm:$0x1]
    %v1247 = vperm.slane %v1245, 0
    %v1250 = vsel %vm70, %v1241, 0
    %1252 = vmatpush.bf16.msra.mxu0 0
    %1253 = vmatpush.bf16.msra.mxu0 0
    %1254 = vmatpush.bf16.msra.mxu0 0
    %1255 = vmatpush.bf16.msra.mxu0 0
    %1256 = vmatpush.bf16.msra.mxu0 0
    %1257 = vmatpush.bf16.msra.mxu0 0
    %1258 = vmatpush.bf16.msra.mxu0 %v1243
    %1259 = vmatpush.bf16.msra.mxu0 %v1242
    %1260 = vmatmul.bf16.gmra.mxu0 %v1250
    %v1261 = vpop.f32.mrf.mxu0
    %v1262 = vadd.f32 %v1247, %v1261
    %v1263 = vpop.f32.mrf.mxu0
    %v1264 = vadd.f32 %v1247, %v1263
    %1265 = vdwg.mxu0
    %v1266 = vmul.f32 %v1262, 0.5
    %v1267 = vmul.f32 %v1264, 0.5
    %v1268 = vmul.f32 %v1262, 0.044715
    %v1269 = vmul.f32 %v1264, 0.044715
    %v1270 = vmul.f32 %v1268, %v1262
    %v1271 = vmul.f32 %v1269, %v1264
    %v1272 = vmul.f32 %v1270, %v1262
    %v1273 = vmul.f32 %v1271, %v1264
    %v1274 = vadd.f32 %v1262, %v1272
    %v1275 = vadd.f32 %v1264, %v1273
    %v1276 = vmul.f32 %v1274, 0.7978846
    %v1277 = vmul.f32 %v1275, 0.7978846
    %v1278 = vtanh.pop %v1276
    %v1279 = vtanh.pop %v1277
    %v1280 = vadd.f32 %v1278, 1.0
    %v1281 = vadd.f32 %v1279, 1.0
    %v1282 = vmul.f32 %v1266, %v1280
    %v1283 = vmul.f32 %v1267, %v1281
    %s1284 = scalar_lea.vmem %s14, 128
    %v1285 = vld [vmem:[%s1284] sm:$0xff]
    %v1286 = vld [vmem:[%s1284 + $0x8] sm:$0xff]
    %v1287 = vld [vmem:[%s1284 + $0x10] sm:$0xff]
    %v1288 = vld [vmem:[%s1284 + $0x18] sm:$0xff]
    %v1289 = vld [vmem:[%s1284 + $0x20] sm:$0xff]
    %v1290 = vld [vmem:[%s1284 + $0x28] sm:$0xff]
    %v1291 = vld [vmem:[%s1284 + $0x30] sm:$0xff]
    %v1292 = vld [vmem:[%s1284 + $0x38] sm:$0xff]
    %v1293 = vld [vmem:[%s1284 + $0x40] sm:$0xff]
    %v1294 = vld [vmem:[%s1284 + $0x48] sm:$0xff]
    %v1295 = vld [vmem:[%s1284 + $0x50] sm:$0xff]
    %v1296 = vld [vmem:[%s1284 + $0x58] sm:$0xff]
    %v1297 = vld [vmem:[%s1284 + $0x60] sm:$0xff]
    %v1298 = vld [vmem:[%s1284 + $0x68] sm:$0xff]
    %v1299 = vld [vmem:[%s1284 + $0x70] sm:$0xff]
    %v1300 = vld [vmem:[%s1284 + $0x78] sm:$0xff]
    %v1301 = vpack.c.bf16 %v1283, %v1282
    %v1302 = vpack.c.bf16 %v1286, %v1285
    %v1303 = vpack.c.bf16 %v1288, %v1287
    %v1304 = vpack.c.bf16 %v1290, %v1289
    %v1305 = vpack.c.bf16 %v1292, %v1291
    %v1306 = vpack.c.bf16 %v1294, %v1293
    %v1307 = vpack.c.bf16 %v1296, %v1295
    %v1308 = vpack.c.bf16 %v1298, %v1297
    %v1309 = vpack.c.bf16 %v1300, %v1299
    %1310 = vmatpush.bf16.msra.mxu0 %v1309
    %1311 = vmatpush.bf16.msra.mxu0 %v1308
    %1312 = vmatpush.bf16.msra.mxu0 %v1307
    %1313 = vmatpush.bf16.msra.mxu0 %v1306
    %1314 = vmatpush.bf16.msra.mxu0 %v1305
    %1315 = vmatpush.bf16.msra.mxu0 %v1304
    %1316 = vmatpush.bf16.msra.mxu0 %v1303
    %1317 = vmatpush.bf16.msra.mxu0 %v1302
    %1318 = vmatmul.bf16.gmra.mxu0 %v1301
    %v1319 = vpop.f32.mrf.mxu0
    %v1320 = vadd.f32 0.0, %v1319
    %v1321 = vpop.f32.mrf.mxu0
    %v1322 = vadd.f32 0.0, %v1321
    %1323 = vdwg.mxu0
    %v1324 = vadd.f32 %v1176, %v1320
    %v1325 = vadd.f32 %v1177, %v1322
    %s1326 = scalar_lea.vmem %s15, 1
    %v1327 = vld [vmem:[%s1326] sm:$0x1]
    %v1329 = vperm.slane %v1327, 0
    %v1331 = vadd.f32 %v1324, %v1329
    %v1332 = vadd.f32 %v1325, %v1329
    %v1333 = vld [vmem:[%s16] sm:$0x1]
    %v1334 = vld [vmem:[%s17] sm:$0x1]
    %v1335 = vsel %vm70, %v1331, 0.0
    %1336 = vadd.xlane.f32.xlu0 %v1335
    %v1337 = vpop.xlane.xlu0 %1336
    %v1338 = vsel %vm70, %v1332, 0.0
    %1339 = vadd.xlane.f32.xlu0 %v1338
    %v1340 = vpop.xlane.xlu0 %1339
    %v1341 = vmul.f32 %v1337, %v83
    %v1342 = vmul.f32 %v1340, %v83
    %v1343 = vsub.f32 %v1331, %v1341
    %v1344 = vsub.f32 %v1332, %v1342
    %v1345 = vmul.f32 %v1343, %v1343
    %v1346 = vmul.f32 %v1344, %v1344
    %v1347 = vsel %vm70, %v1345, 0.0
    %1348 = vadd.xlane.f32.xlu0 %v1347
    %v1349 = vpop.xlane.xlu0 %1348
    %v1350 = vsel %vm70, %v1346, 0.0
    %1351 = vadd.xlane.f32.xlu0 %v1350
    %v1352 = vpop.xlane.xlu0 %1351
    %v1353 = vmul.f32 %v1349, %v83
    %v1354 = vmul.f32 %v1352, %v83
    %v1355 = vadd.f32 %v1353, 1e-05
    %v1356 = vadd.f32 %v1354, 1e-05
    %v1357 = vrsqrt.pop %v1355
    %v1358 = vmul.f32 %v1357, %v1355
    %v1359 = vmul.f32 %v1358, %v1357
    %v1360 = vmul.f32 0.5, %v1359
    %v1361 = vsub.f32 1.5, %v1360
    %v1362 = vmul.f32 %v1357, %v1361
    %vm1363 = vweird.f32 %v1355
    %vm1364 = vweird.f32 %v1357
    %vm1365 = vmor %vm1363, %vm1364
    %v1366 = vsel %vm1365, %v1357, %v1362
    %v1367 = vrsqrt.pop %v1356
    %v1368 = vmul.f32 %v1367, %v1356
    %v1369 = vmul.f32 %v1368, %v1367
    %v1370 = vmul.f32 0.5, %v1369
    %v1371 = vsub.f32 1.5, %v1370
    %v1372 = vmul.f32 %v1367, %v1371
    %vm1373 = vweird.f32 %v1356
    %vm1374 = vweird.f32 %v1367
    %vm1375 = vmor %vm1373, %vm1374
    %v1376 = vsel %vm1375, %v1367, %v1372
    %v1377 = vmul.f32 %v1343, %v1366
    %v1378 = vmul.f32 %v1344, %v1376
    %v1380 = vperm.slane %v1333, 0
    %v1382 = vmul.f32 %v1377, %v1380
    %v1383 = vmul.f32 %v1378, %v1380
    %v1385 = vperm.slane %v1334, 0
    %v1387 = vadd.f32 %v1382, %v1385
    %v1388 = vadd.f32 %v1383, %v1385
    %v1389 = vld [vmem:[%s3] sm:$0xff]
    %v1390 = vld [vmem:[%s3 + $0x8] sm:$0xff]
    %v1391 = vld [vmem:[%s3 + $0x10] sm:$0xff]
    %v1392 = vld [vmem:[%s3 + $0x18] sm:$0xff]
    %v1393 = vld [vmem:[%s3 + $0x20] sm:$0xff]
    %v1394 = vld [vmem:[%s3 + $0x28] sm:$0xff]
    %v1395 = vld [vmem:[%s3 + $0x30] sm:$0xff]
    %v1396 = vld [vmem:[%s3 + $0x38] sm:$0xff]
    %v1397 = vld [vmem:[%s3 + $0x40] sm:$0xff]
    %v1398 = vld [vmem:[%s3 + $0x48] sm:$0xff]
    %v1399 = vld [vmem:[%s3 + $0x50] sm:$0xff]
    %v1400 = vld [vmem:[%s3 + $0x58] sm:$0xff]
    %v1401 = vld [vmem:[%s3 + $0x60] sm:$0xff]
    %v1402 = vld [vmem:[%s3 + $0x68] sm:$0xff]
    %v1403 = vld [vmem:[%s3 + $0x70] sm:$0xff]
    %v1404 = vld [vmem:[%s3 + $0x78] sm:$0xff]
    %v1406 = vsel %vm70, %v1387, 0
    %v1409 = vsel %vm70, %v1388, 0
    %v1412 = vsel %vm70, %v1389, 0
    %v1415 = vsel %vm70, %v1390, 0
    %v1418 = vsel %vm70, %v1391, 0
    %v1421 = vsel %vm70, %v1392, 0
    %v1424 = vsel %vm70, %v1393, 0
    %v1427 = vsel %vm70, %v1394, 0
    %v1430 = vsel %vm70, %v1395, 0
    %v1433 = vsel %vm70, %v1396, 0
    %v1436 = vsel %vm70, %v1397, 0
    %v1439 = vsel %vm70, %v1398, 0
    %v1442 = vsel %vm70, %v1399, 0
    %v1445 = vsel %vm70, %v1400, 0
    %v1448 = vsel %vm70, %v1401, 0
    %v1451 = vsel %vm70, %v1402, 0
    %v1454 = vsel %vm70, %v1403, 0
    %v1457 = vsel %vm70, %v1404, 0
    %1459 = vmatpush.xpose.msra.mxu0 %v1457
    %1460 = vmatpush.xpose.msra.mxu0 %v1454
    %1461 = vmatpush.xpose.msra.mxu0 %v1451
    %1462 = vmatpush.xpose.msra.mxu0 %v1448
    %1463 = vmatpush.xpose.msra.mxu0 %v1445
    %1464 = vmatpush.xpose.msra.mxu0 %v1442
    %1465 = vmatpush.xpose.msra.mxu0 %v1439
    %1466 = vmatpush.xpose.msra.mxu0 %v1436
    %1467 = vmatpush.xpose.msra.mxu0 %v1433
    %1468 = vmatpush.xpose.msra.mxu0 %v1430
    %1469 = vmatpush.xpose.msra.mxu0 %v1427
    %1470 = vmatpush.xpose.msra.mxu0 %v1424
    %1471 = vmatpush.xpose.msra.mxu0 %v1421
    %1472 = vmatpush.xpose.msra.mxu0 %v1418
    %1473 = vmatpush.xpose.msra.mxu0 %v1415
    %1474 = vmatpush.xpose.msra.mxu0 %v1412
    %1475 = vmatmul.f32.gmra.mxu0 %v1406
    %v1476 = vpop.f32.mrf.mxu0
    %v1477 = vadd.f32 0.0, %v1476
    %1478 = vmatmul.f32.gmra.mxu0 %v1409
    %v1479 = vpop.f32.mrf.mxu0
    %v1480 = vadd.f32 0.0, %v1479
    %1481 = vdwg.mxu0
    %1482 = vst [vmem:[#allocation2] sm:$0xff] %v1477
    %1483 = vst [vmem:[#allocation2 + $0x8] sm:$0xff] %v1480
    %1484 = vmax.xlane.f32.xlu0 %v1477
    %v1485 = vpop.xlane.xlu0 %1484
    %1486 = vmax.xlane.f32.xlu0 %v1480
    %v1487 = vpop.xlane.xlu0 %1486
    %v1488 = vsub.f32 %v1477, %v1485
    %v1489 = vsub.f32 %v1480, %v1487
    %v1490 = vmul.f32 %v1488, 1.442695
    %v1491 = vpow.pop %v1490
    %v1492 = vmul.f32 %v1489, 1.442695
    %v1493 = vpow.pop %v1492
    %1494 = vadd.xlane.f32.xlu0 %v1491
    %v1495 = vpop.xlane.xlu0 %1494
    %1496 = vadd.xlane.f32.xlu0 %v1493
    %v1497 = vpop.xlane.xlu0 %1496
    %v1498 = vlog2.pop %v1495
    %v1499 = vmul.f32 %v1498, 0.6931472
    %v1500 = vlog2.pop %v1497
    %v1501 = vmul.f32 %v1500, 0.6931472
    %v1502 = vadd.f32 %v1499, %v1485
    %v1503 = vadd.f32 %v1501, %v1487
    %v1504 = vlaneseq
    %v1505 = vand.u32 %v1504, 127
    %v1506 = vld [vmem:[%s1] sm:$0xff]
    %v1507 = vld [vmem:[%s1 + $0x8] sm:$0xff]
    %1508 = vset.pattern.permute.xlu0 0
    %1509 = vperm.xlu0 %1508, %v1506
    %v1510 = vpop.permute.xlu0 %1509
    %1511 = vset.pattern.permute.xlu0 0
    %1512 = vperm.xlu0 %1511, %v1507
    %v1513 = vpop.permute.xlu0 %1512
    %vm1514 = vcmp.eq.s32.totalorder %v1505, %v1510
    %vm1515 = vcmp.eq.s32.totalorder %v1505, %v1513
    %v1516 = vsel %vm1514, %v1477, 0.0
    %v1517 = vsel %vm1515, %v1480, 0.0
    %1518 = vadd.xlane.f32.xlu0 %v1516
    %v1519 = vpop.xlane.xlu0 %1518
    %1520 = vadd.xlane.f32.xlu0 %v1517
    %v1521 = vpop.xlane.xlu0 %1520
    %v1522 = vsub.f32 %v1502, %v1519
    %v1523 = vsub.f32 %v1503, %v1521
    %v1524 = vadd.f32 %v1522, %v1523
    %v1525 = vrot.slane %v1524, 4
    %v1526 = vadd.f32 %v1524, %v1525
    %v1527 = vrot.slane %v1526, 2
    %v1528 = vadd.f32 %v1526, %v1527
    %v1529 = vrot.slane %v1528, 1
    %v1530 = vadd.f32 %v1528, %v1529
    %v1531 = vmul.f32 %v1530, 0.0625
    %1532 = vst [vmem:[#allocation4] sm:$0x1] %v1531
    // Predicated region
    $region74: #{gpt_forward.1} parent=1 // pred_check
      _
    $region75: #{gpt_forward.1} parent=1 // pred_check_branch
      %1534 = sbr.rel (0) target = $region77
    $region76: #{gpt_forward.1} parent=1 // pred_region
      %1536 = vsyncadd [#allocation3], 0
      %s1537 = sshll.u32 [#allocation2], 4
      %s1538 = int_to_ptr.vmem [resolvable:$true] %s1537
      %s1539 = sshll.u32 %s18, 4
      %s1540 = int_to_ptr.hbm [resolvable:$true] %s1539
      %1545 = dma.vmem_to_hbm [thread:$0]  %s1538, 256, %s1540, [#allocation3], 128, 128, 8
    $region77: #{gpt_forward.1} parent=1 // pred_fallthru
      _
    // Predicated region
    $region78: #{gpt_forward.1} parent=1 // pred_check
      _
    $region79: #{gpt_forward.1} parent=1 // pred_check_branch
      %1547 = sbr.rel (0) target = $region81
    $region80: #{gpt_forward.1} parent=1 // pred_region
      %1549 = vsyncadd [#allocation5], 0
      %s1551 = sshll.u32 [#allocation4], 4
      %s1552 = int_to_ptr.vmem [resolvable:$true] %s1551
      %s1553 = sshll.u32 %s19, 4
      %s1554 = int_to_ptr.hbm [resolvable:$true] %s1553
      %1556 = dma.vmem_to_hbm [thread:$0]  %s1552, 16, %s1554, [#allocation5]
    $region81: #{gpt_forward.1} parent=1 // pred_fallthru
      _
    // Predicated region
    $region82: #{gpt_forward.1} parent=1 // pred_check
      _
    $region83: #{gpt_forward.1} parent=1 // pred_check_branch
      %1558 = sbr.rel (0) target = $region85
    $region84: #{gpt_forward.1} parent=1 // pred_region
      %1560 = dma.done [#allocation3], 256
    $region85: #{gpt_forward.1} parent=1 // pred_fallthru
      _
    // Predicated region
    $region86: #{gpt_forward.1} parent=1 // pred_check
      _
    $region87: #{gpt_forward.1} parent=1 // pred_check_branch
      %1562 = sbr.rel (0) target = $region89
    $region88: #{gpt_forward.1} parent=1 // pred_region
      %1564 = dma.done [#allocation5], 16
    $region89: #{gpt_forward.1} parent=1 // pred_fallthru
      _
    %1565 = vsyncpa [#allocation3], 1
    %1566 = vsyncpa [#allocation5], 1

</llo_original>
